<compile_context>
chip_gen: v7x
topology: tpu7x:2x2x1
jax: 0.10.0
libtpu: 0.0.40
codegen_flags: <defaults>
</compile_context>

<pallas_src>
import functools

import jax
import jax.numpy as jnp
from jax import lax
from jax.experimental import pallas as pl
from jax.experimental.pallas import tpu as pltpu


# ----------------------------------------------------------------------------
# VMEM budget (generation-aware)
# ----------------------------------------------------------------------------
_VMEM_LIMIT = None


def _get_vmem_limit():
    """~100 MiB on 128 MiB-VMEM parts (v5e/v6e); 48 MiB fallback (safe on v7x)."""
    global _VMEM_LIMIT
    if _VMEM_LIMIT is not None:
        return _VMEM_LIMIT
    limit = 48 * 1024 * 1024
    try:
        cap = int(pltpu.get_tpu_info().vmem_capacity_bytes)
        if cap >= 96 * 1024 * 1024:
            limit = 100 * 1024 * 1024
    except Exception:
        pass
    _VMEM_LIMIT = limit
    return limit


def _compiler_params(sems):
    return pltpu.CompilerParams(dimension_semantics=sems,
                                vmem_limit_bytes=_get_vmem_limit())


def _tile(dim, target):
    """Largest 128-aligned tile <= target that divides dim; full dim if none/small."""
    if dim <= target:
        return dim
    start = target - (target % 128) if target >= 128 else target
    for cand in range(start, 0, -128):
        if dim % cand == 0:
            return cand
    return dim


def _default_tm(M):
    # bigger m-tiles where VMEM allows (cuts weight re-streaming); 512 on v7x.
    return _tile(M, 1024 if _get_vmem_limit() >= 96 * 1024 * 1024 else 512)


# ----------------------------------------------------------------------------
# Kernels
# ----------------------------------------------------------------------------
def _layernorm(h, w, b, eps=1e-5):
    mu = jnp.mean(h, axis=-1, keepdims=True)
    var = jnp.mean(jnp.square(h - mu), axis=-1, keepdims=True)
    return (h - mu) * lax.rsqrt(var + eps) * w + b


def ln_matmul_kernel(x_ref, lnw_ref, lnb_ref, w_ref, b_ref, o_ref, h_sc, *, gelu):
    """o = [GELU](LayerNorm(x) @ W + b). LN hoisted: computed once per m-tile."""
    @pl.when(pl.program_id(1) == 0)
    def _ln():
        h = _layernorm(x_ref[...].astype(jnp.float32), lnw_ref[...], lnb_ref[...])
        h_sc[...] = h.astype(jnp.bfloat16)

    y = jnp.dot(h_sc[...], w_ref[...], preferred_element_type=jnp.float32) + b_ref[...]
    if gelu:
        # exact GELU (PyTorch nn.GELU default).
        # TODO(synk): switch to tanh-approx GELU on v5e if the reference Block allows.
        y = 0.5 * y * (1.0 + lax.erf(y * 0.7071067811865476))
    o_ref[...] = y.astype(o_ref.dtype)


def matmul_resid_kernel(x_ref, r_ref, w_ref, b_ref, o_ref):
    """o = resid + x @ W + b (x/W bf16, accumulate and add in f32)."""
    y = jnp.dot(x_ref[...], w_ref[...], preferred_element_type=jnp.float32)
    o_ref[...] = (r_ref[...] + y + b_ref[...]).astype(o_ref.dtype)


def flash_attn_kernel(q_ref, k_ref, v_ref, o_ref, m_sc, l_sc, acc_sc, *, scale):
    """Causal flash attention for one (batch*head, q-tile); KV tiles on grid axis 2.

    tq == tk, so: ki < qi -> unmasked tile, ki == qi -> diagonal (masked) tile,
    ki > qi -> fully above the diagonal (skipped; KV DMA elided via clamped index_map).
    """
    tq = q_ref.shape[1]
    tk = k_ref.shape[1]
    qi = pl.program_id(1)
    ki = pl.program_id(2)

    @pl.when(ki == 0)
    def _init():
        m_sc[...] = jnp.full_like(m_sc, -jnp.inf)
        l_sc[...] = jnp.zeros_like(l_sc)
        acc_sc[...] = jnp.zeros_like(acc_sc)

    def step(masked):
        # fold 1/sqrt(hd) into the (tq, hd) q tile (cheaper than scaling (tq, tk) s).
        q = (q_ref[0].astype(jnp.float32) * scale).astype(jnp.bfloat16)
        k = k_ref[0]
        v = v_ref[0]
        s = lax.dot_general(q, k, (((1,), (1,)), ((), ())),
                            preferred_element_type=jnp.float32)          # (tq, tk) f32
        if masked:
            row = qi * tq + lax.broadcasted_iota(jnp.int32, (tq, tk), 0)
            col = ki * tk + lax.broadcasted_iota(jnp.int32, (tq, tk), 1)
            s = jnp.where(col <= row, s, jnp.float32(-1e30))
        m_prev = m_sc[...]
        m_new = jnp.maximum(m_prev, jnp.max(s, axis=-1, keepdims=True))
        alpha = jnp.exp(m_prev - m_new)
        p = jnp.exp(s - m_new)
        l_sc[...] = alpha * l_sc[...] + jnp.sum(p, axis=-1, keepdims=True)
        acc_sc[...] = alpha * acc_sc[...] + jnp.dot(
            p.astype(v.dtype), v, preferred_element_type=jnp.float32)
        m_sc[...] = m_new

    pl.when(ki < qi)(lambda: step(False))    # fully below diagonal: no mask work
    pl.when(ki == qi)(lambda: step(True))    # diagonal tile: build/apply causal mask

    @pl.when(ki == pl.num_programs(2) - 1)
    def _finalize():
        inv_l = pl.reciprocal(l_sc[...], approx=True)
        o_ref[0] = (acc_sc[...] * inv_l).astype(o_ref.dtype)


def ln_head_kernel(x_ref, lnw_ref, lnb_ref, wte_ref, o_ref, h_sc):
    """logits tile = LayerNorm(x) @ wte[v_tile].T (tied embedding, no bias).
    LN hoisted out of the vocab loop via VMEM scratch."""
    @pl.when(pl.program_id(1) == 0)
    def _ln():
        h_sc[...] = _layernorm(x_ref[...], lnw_ref[...], lnb_ref[...]).astype(jnp.bfloat16)

    o_ref[...] = lax.dot_general(
        h_sc[...], wte_ref[...], (((1,), (1,)), ((), ())),
        preferred_element_type=jnp.float32).astype(o_ref.dtype)


# ----------------------------------------------------------------------------
# Pallas-call wrappers
# ----------------------------------------------------------------------------
def ln_matmul(x, lnw, lnb, w, b, *, gelu=False, tm=None, tn=1024):
    """x: (M, C) f32; w: (C, N) bf16; b: (1, N) f32 -> (M, N) bf16."""
    M, C = x.shape
    N = w.shape[1]
    tm = _default_tm(M) if tm is None else _tile(M, tm)
    tn = _tile(N, tn)
    grid = (M // tm, N // tn)
    return pl.pallas_call(
        functools.partial(ln_matmul_kernel, gelu=gelu),
        out_shape=jax.ShapeDtypeStruct((M, N), jnp.bfloat16),
        grid=grid,
        in_specs=[
            pl.BlockSpec((tm, C), lambda mi, ni: (mi, 0)),
            pl.BlockSpec((1, C), lambda mi, ni: (0, 0)),
            pl.BlockSpec((1, C), lambda mi, ni: (0, 0)),
            pl.BlockSpec((C, tn), lambda mi, ni: (0, ni)),
            pl.BlockSpec((1, tn), lambda mi, ni: (0, ni)),
        ],
        out_specs=pl.BlockSpec((tm, tn), lambda mi, ni: (mi, ni)),
        scratch_shapes=[pltpu.VMEM((tm, C), jnp.bfloat16)],   # cached LN(x) tile
        compiler_params=_compiler_params(("parallel", "arbitrary")),
    )(x, lnw, lnb, w, b)


def matmul_resid(x, resid, w, b, *, tm=None, tn=1024):
    """x: (M, K) bf16; resid: (M, N) f32; w: (K, N) bf16; b: (1, N) f32 -> (M, N) f32."""
    M, K = x.shape
    N = w.shape[1]
    tm = _default_tm(M) if tm is None else _tile(M, tm)
    tn = _tile(N, tn)
    grid = (M // tm, N // tn)
    return pl.pallas_call(
        matmul_resid_kernel,
        out_shape=jax.ShapeDtypeStruct((M, N), jnp.float32),
        grid=grid,
        in_specs=[
            pl.BlockSpec((tm, K), lambda mi, ni: (mi, 0)),
            pl.BlockSpec((tm, tn), lambda mi, ni: (mi, ni)),
            pl.BlockSpec((K, tn), lambda mi, ni: (0, ni)),
            pl.BlockSpec((1, tn), lambda mi, ni: (0, ni)),
        ],
        out_specs=pl.BlockSpec((tm, tn), lambda mi, ni: (mi, ni)),
        compiler_params=_compiler_params(("parallel", "parallel")),
    )(x, resid, w, b)


def flash_attention(q, k, v, *, tile=512):
    """q, k, v: (B*H, T, hd) bf16 -> (B*H, T, hd) bf16, causal."""
    BH, T, hd = q.shape
    t = _tile(T, tile)
    scale = 1.0 / float(hd) ** 0.5
    n_t = T // t
    grid = (BH, n_t, n_t)

    def q_map(b, qi, ki):
        return (b, qi, 0)

    def kv_map(b, qi, ki):
        # clamp -> skipped (fully-above-diagonal) tiles repeat the previous block
        # index, so no KV DMA is issued for them.
        return (b, jnp.minimum(ki, qi), 0)

    return pl.pallas_call(
        functools.partial(flash_attn_kernel, scale=scale),
        out_shape=jax.ShapeDtypeStruct((BH, T, hd), jnp.bfloat16),
        grid=grid,
        in_specs=[
            pl.BlockSpec((1, t, hd), q_map),
            pl.BlockSpec((1, t, hd), kv_map),
            pl.BlockSpec((1, t, hd), kv_map),
        ],
        out_specs=pl.BlockSpec((1, t, hd), q_map),
        scratch_shapes=[
            pltpu.VMEM((t, 1), jnp.float32),    # m (running max)
            pltpu.VMEM((t, 1), jnp.float32),    # l (running sum)
            pltpu.VMEM((t, hd), jnp.float32),   # acc
        ],
        compiler_params=_compiler_params(("parallel", "parallel", "arbitrary")),
    )(q, k, v)


def gpt_head(x, lnf_w, lnf_b, wte, *, tm=None, tv=2048):
    """x: (B, T, C) f32; wte: (V, C) bf16 (tied) -> logits (B, T, V) f32."""
    B, T, C = x.shape
    V = wte.shape[0]
    xf = x.reshape(B * T, C)
    M = B * T

    # Pad vocab to a multiple of 1024 so the wte tile stays (tv, C) instead of the
    # whole table (50257 -> 51200, tv stays 2048 and stores stay lane-dense).
    # TODO(synk): pre-pad wte once at parameter-load time to avoid the per-call pad.
    pad = ((-V) % 1024) if V > tv else 0
    wte_p = jnp.pad(wte, ((0, pad), (0, 0))) if pad else wte
    Vp = V + pad

    tm = _default_tm(M) if tm is None else _tile(M, tm)
    tvv = _tile(Vp, tv)
    grid = (M // tm, Vp // tvv)
    logits = pl.pallas_call(
        ln_head_kernel,
        out_shape=jax.ShapeDtypeStruct((M, Vp), jnp.float32),
        grid=grid,
        in_specs=[
            pl.BlockSpec((tm, C), lambda mi, vi: (mi, 0)),
            pl.BlockSpec((1, C), lambda mi, vi: (0, 0)),
            pl.BlockSpec((1, C), lambda mi, vi: (0, 0)),
            pl.BlockSpec((tvv, C), lambda mi, vi: (vi, 0)),
        ],
        out_specs=pl.BlockSpec((tm, tvv), lambda mi, vi: (mi, vi)),
        scratch_shapes=[pltpu.VMEM((tm, C), jnp.bfloat16)],   # cached LN(x) tile
        compiler_params=_compiler_params(("parallel", "arbitrary")),
    )(xf, lnf_w, lnf_b, wte_p)
    if pad:
        logits = logits[:, :V]
    return logits.reshape(B, T, V)


def gpt_block(x, layer, n_head):
    """One pre-LN transformer block. x: (B, T, C) f32 residual stream."""
    B, T, C = x.shape
    hd = C // n_head
    (ln1w, ln1b, wqkv, bqkv, wproj, bproj,
     ln2w, ln2b, wfc, bfc, wmp, bmp) = layer

    xf = x.reshape(B * T, C)

    # --- attention branch: LN1 + QKV proj (fused) -> flash attention -> proj + residual
    qkv = ln_matmul(xf, ln1w, ln1b, wqkv, bqkv)                    # (B*T, 3C) bf16
    qkv = qkv.reshape(B, T, 3, n_head, hd)
    # TODO(synk): fold these bf16 head transposes into head-indexing BlockSpecs of the
    # attention kernel to save one HBM round-trip of the QKV tensor per layer.
    q = qkv[:, :, 0].transpose(0, 2, 1, 3).reshape(B * n_head, T, hd)
    k = qkv[:, :, 1].transpose(0, 2, 1, 3).reshape(B * n_head, T, hd)
    v = qkv[:, :, 2].transpose(0, 2, 1, 3).reshape(B * n_head, T, hd)
    attn = flash_attention(q, k, v)                                # (B*H, T, hd) bf16
    attn = attn.reshape(B, n_head, T, hd).transpose(0, 2, 1, 3).reshape(B * T, C)
    xf = matmul_resid(attn, xf, wproj, bproj)                      # (B*T, C) f32

    # --- MLP branch: LN2 + fc + GELU (fused) -> proj + residual
    h = ln_matmul(xf, ln2w, ln2b, wfc, bfc, gelu=True)             # (B*T, 4C) bf16
    xf = matmul_resid(h, xf, wmp, bmp)                             # (B*T, C) f32
    return xf.reshape(B, T, C)


def gpt_forward(idx, params, n_head):
    """idx: [B, T] int32 token ids -> logits [B, T, vocab] float32."""
    wte = params["wte"]                                 # (V, C) bf16 (tied with lm_head)
    x = jnp.take(wte, idx, axis=0).astype(jnp.float32)  # embedding gather (XLA glue)
    for layer in params["blocks"]:
        x = gpt_block(x, layer, n_head)
    return gpt_head(x, params["lnf_w"], params["lnf_b"], wte)


# ----------------------------------------------------------------------------
# Deterministic parameter init (GPT-2 style: N(0, 0.02) weights bf16, zero biases)
# ----------------------------------------------------------------------------
def init_params(key, vocab_size, n_embd, n_layer):
    C = n_embd
    keys = jax.random.split(key, 1 + 4 * n_layer)
    wte = (0.02 * jax.random.normal(keys[0], (vocab_size, C), jnp.float32)
           ).astype(jnp.bfloat16)

    blocks = []
    for li in range(n_layer):
        k0, k1, k2, k3 = keys[1 + 4 * li: 1 + 4 * (li + 1)]
        layer = (
            jnp.ones((1, C), jnp.float32),                                   # ln1 weight
            jnp.zeros((1, C), jnp.float32),                                  # ln1 bias
            (0.02 * jax.random.normal(k0, (C, 3 * C))).astype(jnp.bfloat16), # W_qkv [in,out]
            jnp.zeros((1, 3 * C), jnp.float32),                              # b_qkv
            (0.02 * jax.random.normal(k1, (C, C))).astype(jnp.bfloat16),     # W_attn_proj
            jnp.zeros((1, C), jnp.float32),                                  # b_attn_proj
            jnp.ones((1, C), jnp.float32),                                   # ln2 weight
            jnp.zeros((1, C), jnp.float32),                                  # ln2 bias
            (0.02 * jax.random.normal(k2, (C, 4 * C))).astype(jnp.bfloat16), # W_fc
            jnp.zeros((1, 4 * C), jnp.float32),                              # b_fc
            (0.02 * jax.random.normal(k3, (4 * C, C))).astype(jnp.bfloat16), # W_mlp_proj
            jnp.zeros((1, C), jnp.float32),                                  # b_mlp_proj
        )
        blocks.append(layer)

    return {
        "wte": wte,
        "blocks": blocks,
        "lnf_w": jnp.ones((1, C), jnp.float32),
        "lnf_b": jnp.zeros((1, C), jnp.float32),
    }


# ----------------------------------------------------------------------------
if __name__ == "__main__":
    B, T = 2, 8
    vocab_size, n_embd, n_head, n_layer = 128, 32, 4, 2

    key = jax.random.PRNGKey(0)
    k_idx, k_par = jax.random.split(key)
    idx = jax.random.randint(k_idx, (B, T), 0, vocab_size, dtype=jnp.int32)
    params = init_params(k_par, vocab_size, n_embd, n_layer)

    fwd = jax.jit(lambda i, p: gpt_forward(i, p, n_head))
    logits = fwd(idx, params)
    logits = jax.block_until_ready(logits)

    assert logits.shape == (B, T, vocab_size), logits.shape
    assert bool(jnp.all(jnp.isfinite(logits))), "non-finite logits"
    print("KERNEL_OK")
</pallas_src>

<mosaic_0001>
module attributes {stable_mosaic.version = 11 : i64} {
  func.func @ln_matmul_kernel(%arg0: i32, %arg1: i32, %arg2: memref<16x32xf32, #tpu.memory_space<vmem>>, %arg3: memref<1x32xf32, #tpu.memory_space<vmem>>, %arg4: memref<1x32xf32, #tpu.memory_space<vmem>>, %arg5: memref<32x96xbf16, #tpu.memory_space<vmem>>, %arg6: memref<1x96xf32, #tpu.memory_space<vmem>>, %arg7: memref<16x96xbf16, #tpu.memory_space<vmem>>, %arg8: memref<16x32xbf16, #tpu.memory_space<vmem>>) attributes {dimension_semantics = [#tpu.dimension_semantics<parallel>, #tpu.dimension_semantics<arbitrary>], iteration_bounds = array<i64: 1, 1>, scalar_prefetch = 0 : i64, scratch_operands = 1 : i64, tpu.core_type = #tpu.core_type<tc>, window_params = [{transform_indices = @transform_0, window_bounds = array<i64: 16, 32>}, {pipeline_mode = #tpu.pipeline_mode<synchronous>, transform_indices = @transform_1, window_bounds = array<i64: 1, 32>}, {pipeline_mode = #tpu.pipeline_mode<synchronous>, transform_indices = @transform_2, window_bounds = array<i64: 1, 32>}, {transform_indices = @transform_3, window_bounds = array<i64: 32, 96>}, {transform_indices = @transform_4, window_bounds = array<i64: 1, 96>}, {transform_indices = @transform_5, window_bounds = array<i64: 16, 96>}]} {
    %c0_i32 = arith.constant 0 : i32
    %0 = arith.cmpi eq, %arg1, %c0_i32 : i32
    %1 = arith.extui %0 : i1 to i32
    %c0_i32_0 = arith.constant 0 : i32
    %2 = arith.cmpi ne, %1, %c0_i32_0 : i32
    scf.if %2 {
      %c0_8 = arith.constant 0 : index
      %c0_9 = arith.constant 0 : index
      %11 = vector.load %arg2[%c0_8, %c0_9] : memref<16x32xf32, #tpu.memory_space<vmem>>, vector<16x32xf32>
      %c0_10 = arith.constant 0 : index
      %c0_11 = arith.constant 0 : index
      %12 = vector.load %arg3[%c0_10, %c0_11] : memref<1x32xf32, #tpu.memory_space<vmem>>, vector<1x32xf32>
      %c0_12 = arith.constant 0 : index
      %c0_13 = arith.constant 0 : index
      %13 = vector.load %arg4[%c0_12, %c0_13] : memref<1x32xf32, #tpu.memory_space<vmem>>, vector<1x32xf32>
      %cst_14 = arith.constant dense<0.000000e+00> : vector<16xf32>
      %14 = vector.multi_reduction <add>, %11, %cst_14 [1] : vector<16x32xf32> to vector<16xf32>
      %15 = vector.shape_cast %14 : vector<16xf32> to vector<16x1xf32>
      %cst_15 = arith.constant 3.200000e+01 : f32
      %16 = vector.broadcast %cst_15 : f32 to vector<16x1xf32>
      %17 = arith.divf %15, %16 : vector<16x1xf32>
      %18 = vector.broadcast %17 : vector<16x1xf32> to vector<16x32xf32>
      %19 = arith.subf %11, %18 : vector<16x32xf32>
      %20 = arith.mulf %19, %19 : vector<16x32xf32>
      %cst_16 = arith.constant dense<0.000000e+00> : vector<16xf32>
      %21 = vector.multi_reduction <add>, %20, %cst_16 [1] : vector<16x32xf32> to vector<16xf32>
      %22 = vector.shape_cast %21 : vector<16xf32> to vector<16x1xf32>
      %cst_17 = arith.constant 3.200000e+01 : f32
      %23 = vector.broadcast %cst_17 : f32 to vector<16x1xf32>
      %24 = arith.divf %22, %23 : vector<16x1xf32>
      %25 = vector.broadcast %17 : vector<16x1xf32> to vector<16x32xf32>
      %26 = arith.subf %11, %25 : vector<16x32xf32>
      %cst_18 = arith.constant 9.99999974E-6 : f32
      %27 = vector.broadcast %cst_18 : f32 to vector<16x1xf32>
      %28 = arith.addf %24, %27 : vector<16x1xf32>
      %29 = math.rsqrt %28 : vector<16x1xf32>
      %30 = vector.broadcast %29 : vector<16x1xf32> to vector<16x32xf32>
      %31 = arith.mulf %26, %30 : vector<16x32xf32>
      %32 = vector.broadcast %12 : vector<1x32xf32> to vector<16x32xf32>
      %33 = arith.mulf %31, %32 : vector<16x32xf32>
      %34 = vector.broadcast %13 : vector<1x32xf32> to vector<16x32xf32>
      %35 = arith.addf %33, %34 : vector<16x32xf32>
      %36 = arith.truncf %35 : vector<16x32xf32> to vector<16x32xbf16>
      %c0_19 = arith.constant 0 : index
      %c0_20 = arith.constant 0 : index
      %37 = vector.load %arg8[%c0_19, %c0_20] : memref<16x32xbf16, #tpu.memory_space<vmem>>, vector<16x32xbf16>
      tpu.vector_store %arg8[%c0_19, %c0_20], %36 {strides = array<i32>} : memref<16x32xbf16, #tpu.memory_space<vmem>>, vector<16x32xbf16>,
    } else {
    }
    %c0 = arith.constant 0 : index
    %c0_1 = arith.constant 0 : index
    %3 = vector.load %arg8[%c0, %c0_1] : memref<16x32xbf16, #tpu.memory_space<vmem>>, vector<16x32xbf16>
    %c0_2 = arith.constant 0 : index
    %c0_3 = arith.constant 0 : index
    %4 = vector.load %arg5[%c0_2, %c0_3] : memref<32x96xbf16, #tpu.memory_space<vmem>>, vector<32x96xbf16>
    %cst = arith.constant dense<0.000000e+00> : vector<16x96xf32>
    %5 = tpu.matmul %3, %4, %cst {dimension_numbers = #tpu.dot_dimension_numbers<[1], [0], [0], [1], [0, 0, 1, 1], [], []>} : vector<16x32xbf16>, vector<32x96xbf16>, vector<16x96xf32> -> vector<16x96xf32>
    %c0_4 = arith.constant 0 : index
    %c0_5 = arith.constant 0 : index
    %6 = vector.load %arg6[%c0_4, %c0_5] : memref<1x96xf32, #tpu.memory_space<vmem>>, vector<1x96xf32>
    %7 = vector.broadcast %6 : vector<1x96xf32> to vector<16x96xf32>
    %8 = arith.addf %5, %7 : vector<16x96xf32>
    %9 = arith.truncf %8 : vector<16x96xf32> to vector<16x96xbf16>
    %c0_6 = arith.constant 0 : index
    %c0_7 = arith.constant 0 : index
    %10 = vector.load %arg7[%c0_6, %c0_7] : memref<16x96xbf16, #tpu.memory_space<vmem>>, vector<16x96xbf16>
    tpu.vector_store %arg7[%c0_6, %c0_7], %9 {strides = array<i32>} : memref<16x96xbf16, #tpu.memory_space<vmem>>, vector<16x96xbf16>,
    return
  }
  func.func @transform_0(%arg0: i32, %arg1: i32) -> (i32, i32) {
    %c0_i32 = arith.constant 0 : i32
    %c0_i32_0 = arith.constant 0 : i32
    return %arg0, %c0_i32 : i32, i32
  }
  func.func @transform_1(%arg0: i32, %arg1: i32) -> (i32, i32) {
    %c0_i32 = arith.constant 0 : i32
    %c0_i32_0 = arith.constant 0 : i32
    %c0_i32_1 = arith.constant 0 : i32
    return %c0_i32, %c0_i32_0 : i32, i32
  }
  func.func @transform_2(%arg0: i32, %arg1: i32) -> (i32, i32) {
    %c0_i32 = arith.constant 0 : i32
    %c0_i32_0 = arith.constant 0 : i32
    %c0_i32_1 = arith.constant 0 : i32
    return %c0_i32, %c0_i32_0 : i32, i32
  }
  func.func @transform_3(%arg0: i32, %arg1: i32) -> (i32, i32) {
    %c0_i32 = arith.constant 0 : i32
    %c0_i32_0 = arith.constant 0 : i32
    return %c0_i32, %arg1 : i32, i32
  }
  func.func @transform_4(%arg0: i32, %arg1: i32) -> (i32, i32) {
    %c0_i32 = arith.constant 0 : i32
    %c0_i32_0 = arith.constant 0 : i32
    return %c0_i32, %arg1 : i32, i32
  }
  func.func @transform_5(%arg0: i32, %arg1: i32) -> (i32, i32) {
    %c0_i32 = arith.constant 0 : i32
    return %arg0, %arg1 : i32, i32
  }
}

module attributes {stable_mosaic.version = 11 : i64} {
  func.func @flash_attn_kernel(%arg0: i32, %arg1: i32, %arg2: i32, %arg3: memref<1x8x8xbf16, #tpu.memory_space<vmem>>, %arg4: memref<1x8x8xbf16, #tpu.memory_space<vmem>>, %arg5: memref<1x8x8xbf16, #tpu.memory_space<vmem>>, %arg6: memref<1x8x8xbf16, #tpu.memory_space<vmem>>, %arg7: memref<8x1xf32, #tpu.memory_space<vmem>>, %arg8: memref<8x1xf32, #tpu.memory_space<vmem>>, %arg9: memref<8x8xf32, #tpu.memory_space<vmem>>) attributes {dimension_semantics = [#tpu.dimension_semantics<parallel>, #tpu.dimension_semantics<parallel>, #tpu.dimension_semantics<arbitrary>], iteration_bounds = array<i64: 8, 1, 1>, scalar_prefetch = 0 : i64, scratch_operands = 3 : i64, tpu.core_type = #tpu.core_type<tc>, window_params = [{transform_indices = @transform_0, window_bounds = array<i64: 1, 8, 8>}, {transform_indices = @transform_1, window_bounds = array<i64: 1, 8, 8>}, {transform_indices = @transform_2, window_bounds = array<i64: 1, 8, 8>}, {transform_indices = @transform_3, window_bounds = array<i64: 1, 8, 8>}]} {
    %c0_i32 = arith.constant 0 : i32
    %0 = arith.cmpi eq, %arg2, %c0_i32 : i32
    %1 = arith.extui %0 : i1 to i32
    %c0_i32_0 = arith.constant 0 : i32
    %2 = arith.cmpi ne, %1, %c0_i32_0 : i32
    scf.if %2 {
      %cst = arith.constant 0xFF800000 : f32
      %12 = vector.broadcast %cst : f32 to vector<8x1xf32>
      %c0 = arith.constant 0 : index
      %c0_5 = arith.constant 0 : index
      %13 = vector.load %arg7[%c0, %c0_5] : memref<8x1xf32, #tpu.memory_space<vmem>>, vector<8x1xf32>
      tpu.vector_store %arg7[%c0, %c0_5], %12 {strides = array<i32>} : memref<8x1xf32, #tpu.memory_space<vmem>>, vector<8x1xf32>,
      %cst_6 = arith.constant 0.000000e+00 : f32
      %14 = vector.broadcast %cst_6 : f32 to vector<8x1xf32>
      %c0_7 = arith.constant 0 : index
      %c0_8 = arith.constant 0 : index
      %15 = vector.load %arg8[%c0_7, %c0_8] : memref<8x1xf32, #tpu.memory_space<vmem>>, vector<8x1xf32>
      tpu.vector_store %arg8[%c0_7, %c0_8], %14 {strides = array<i32>} : memref<8x1xf32, #tpu.memory_space<vmem>>, vector<8x1xf32>,
      %cst_9 = arith.constant 0.000000e+00 : f32
      %16 = vector.broadcast %cst_9 : f32 to vector<8x8xf32>
      %c0_10 = arith.constant 0 : index
      %c0_11 = arith.constant 0 : index
      %17 = vector.load %arg9[%c0_10, %c0_11] : memref<8x8xf32, #tpu.memory_space<vmem>>, vector<8x8xf32>
      tpu.vector_store %arg9[%c0_10, %c0_11], %16 {strides = array<i32>} : memref<8x8xf32, #tpu.memory_space<vmem>>, vector<8x8xf32>,
    } else {
    }
    %3 = arith.cmpi slt, %arg2, %arg1 : i32
    %4 = arith.extui %3 : i1 to i32
    %c0_i32_1 = arith.constant 0 : i32
    %5 = arith.cmpi ne, %4, %c0_i32_1 : i32
    scf.if %5 {
      %c0 = arith.constant 0 : index
      %c0_5 = arith.constant 0 : index
      %c0_6 = arith.constant 0 : index
      %12 = vector.load %arg3[%c0, %c0_5, %c0_6] : memref<1x8x8xbf16, #tpu.memory_space<vmem>>, vector<1x8x8xbf16>
      %13 = vector.shape_cast %12 : vector<1x8x8xbf16> to vector<8x8xbf16>
      %14 = arith.extf %13 : vector<8x8xbf16> to vector<8x8xf32>
      %cst = arith.constant 0.353553385 : f32
      %15 = vector.broadcast %cst : f32 to vector<8x8xf32>
      %16 = arith.mulf %14, %15 : vector<8x8xf32>
      %17 = arith.truncf %16 : vector<8x8xf32> to vector<8x8xbf16>
      %c0_7 = arith.constant 0 : index
      %c0_8 = arith.constant 0 : index
      %c0_9 = arith.constant 0 : index
      %18 = vector.load %arg4[%c0_7, %c0_8, %c0_9] : memref<1x8x8xbf16, #tpu.memory_space<vmem>>, vector<1x8x8xbf16>
      %19 = vector.shape_cast %18 : vector<1x8x8xbf16> to vector<8x8xbf16>
      %c0_10 = arith.constant 0 : index
      %c0_11 = arith.constant 0 : index
      %c0_12 = arith.constant 0 : index
      %20 = vector.load %arg5[%c0_10, %c0_11, %c0_12] : memref<1x8x8xbf16, #tpu.memory_space<vmem>>, vector<1x8x8xbf16>
      %21 = vector.shape_cast %20 : vector<1x8x8xbf16> to vector<8x8xbf16>
      %cst_13 = arith.constant dense<0.000000e+00> : vector<8x8xf32>
      %22 = tpu.matmul %17, %19, %cst_13 {dimension_numbers = #tpu.dot_dimension_numbers<[1], [1], [0], [0], [0, 0, 1, 0], [], []>} : vector<8x8xbf16>, vector<8x8xbf16>, vector<8x8xf32> -> vector<8x8xf32>
      %c0_14 = arith.constant 0 : index
      %c0_15 = arith.constant 0 : index
      %23 = vector.load %arg7[%c0_14, %c0_15] : memref<8x1xf32, #tpu.memory_space<vmem>>, vector<8x1xf32>
      %cst_16 = arith.constant dense<0xFF800000> : vector<8xf32>
      %24 = vector.multi_reduction <maximumf>, %22, %cst_16 [1] : vector<8x8xf32> to vector<8xf32>
      %25 = vector.shape_cast %24 : vector<8xf32> to vector<8x1xf32>
      %26 = arith.maximumf %23, %25 : vector<8x1xf32>
      %27 = arith.subf %23, %26 : vector<8x1xf32>
      %28 = math.exp %27 : vector<8x1xf32>
      %29 = vector.broadcast %26 : vector<8x1xf32> to vector<8x8xf32>
      %30 = arith.subf %22, %29 : vector<8x8xf32>
      %31 = math.exp %30 : vector<8x8xf32>
      %c0_17 = arith.constant 0 : index
      %c0_18 = arith.constant 0 : index
      %32 = vector.load %arg8[%c0_17, %c0_18] : memref<8x1xf32, #tpu.memory_space<vmem>>, vector<8x1xf32>
      %33 = arith.mulf %28, %32 : vector<8x1xf32>
      %cst_19 = arith.constant dense<0.000000e+00> : vector<8xf32>
      %34 = vector.multi_reduction <add>, %31, %cst_19 [1] : vector<8x8xf32> to vector<8xf32>
      %35 = vector.shape_cast %34 : vector<8xf32> to vector<8x1xf32>
      %36 = arith.addf %33, %35 : vector<8x1xf32>
      %c0_20 = arith.constant 0 : index
      %c0_21 = arith.constant 0 : index
      %37 = vector.load %arg8[%c0_20, %c0_21] : memref<8x1xf32, #tpu.memory_space<vmem>>, vector<8x1xf32>
      tpu.vector_store %arg8[%c0_20, %c0_21], %36 {strides = array<i32>} : memref<8x1xf32, #tpu.memory_space<vmem>>, vector<8x1xf32>,
      %c0_22 = arith.constant 0 : index
      %c0_23 = arith.constant 0 : index
      %38 = vector.load %arg9[%c0_22, %c0_23] : memref<8x8xf32, #tpu.memory_space<vmem>>, vector<8x8xf32>
      %39 = vector.broadcast %28 : vector<8x1xf32> to vector<8x8xf32>
      %40 = arith.mulf %39, %38 : vector<8x8xf32>
      %41 = arith.truncf %31 : vector<8x8xf32> to vector<8x8xbf16>
      %cst_24 = arith.constant dense<0.000000e+00> : vector<8x8xf32>
      %42 = tpu.matmul %41, %21, %cst_24 {dimension_numbers = #tpu.dot_dimension_numbers<[1], [0], [0], [1], [0, 0, 1, 1], [], []>} : vector<8x8xbf16>, vector<8x8xbf16>, vector<8x8xf32> -> vector<8x8xf32>
      %43 = arith.addf %40, %42 : vector<8x8xf32>
      %c0_25 = arith.constant 0 : index
      %c0_26 = arith.constant 0 : index
      %44 = vector.load %arg9[%c0_25, %c0_26] : memref<8x8xf32, #tpu.memory_space<vmem>>, vector<8x8xf32>
      tpu.vector_store %arg9[%c0_25, %c0_26], %43 {strides = array<i32>} : memref<8x8xf32, #tpu.memory_space<vmem>>, vector<8x8xf32>,
      %c0_27 = arith.constant 0 : index
      %c0_28 = arith.constant 0 : index
      %45 = vector.load %arg7[%c0_27, %c0_28] : memref<8x1xf32, #tpu.memory_space<vmem>>, vector<8x1xf32>
      tpu.vector_store %arg7[%c0_27, %c0_28], %26 {strides = array<i32>} : memref<8x1xf32, #tpu.memory_space<vmem>>, vector<8x1xf32>,
    } else {
    }
    %6 = arith.cmpi eq, %arg2, %arg1 : i32
    %7 = arith.extui %6 : i1 to i32
    %c0_i32_2 = arith.constant 0 : i32
    %8 = arith.cmpi ne, %7, %c0_i32_2 : i32
    scf.if %8 {
      %c0 = arith.constant 0 : index
      %c0_5 = arith.constant 0 : index
      %c0_6 = arith.constant 0 : index
      %12 = vector.load %arg3[%c0, %c0_5, %c0_6] : memref<1x8x8xbf16, #tpu.memory_space<vmem>>, vector<1x8x8xbf16>
      %13 = vector.shape_cast %12 : vector<1x8x8xbf16> to vector<8x8xbf16>
      %14 = arith.extf %13 : vector<8x8xbf16> to vector<8x8xf32>
      %cst = arith.constant 0.353553385 : f32
      %15 = vector.broadcast %cst : f32 to vector<8x8xf32>
      %16 = arith.mulf %14, %15 : vector<8x8xf32>
      %17 = arith.truncf %16 : vector<8x8xf32> to vector<8x8xbf16>
      %c0_7 = arith.constant 0 : index
      %c0_8 = arith.constant 0 : index
      %c0_9 = arith.constant 0 : index
      %18 = vector.load %arg4[%c0_7, %c0_8, %c0_9] : memref<1x8x8xbf16, #tpu.memory_space<vmem>>, vector<1x8x8xbf16>
      %19 = vector.shape_cast %18 : vector<1x8x8xbf16> to vector<8x8xbf16>
      %c0_10 = arith.constant 0 : index
      %c0_11 = arith.constant 0 : index
      %c0_12 = arith.constant 0 : index
      %20 = vector.load %arg5[%c0_10, %c0_11, %c0_12] : memref<1x8x8xbf16, #tpu.memory_space<vmem>>, vector<1x8x8xbf16>
      %21 = vector.shape_cast %20 : vector<1x8x8xbf16> to vector<8x8xbf16>
      %cst_13 = arith.constant dense<0.000000e+00> : vector<8x8xf32>
      %22 = tpu.matmul %17, %19, %cst_13 {dimension_numbers = #tpu.dot_dimension_numbers<[1], [1], [0], [0], [0, 0, 1, 0], [], []>} : vector<8x8xbf16>, vector<8x8xbf16>, vector<8x8xf32> -> vector<8x8xf32>
      %c8_i32 = arith.constant 8 : i32
      %23 = arith.muli %arg1, %c8_i32 : i32
      %24 = tpu.iota {dimensions = array<i32: 0>} : vector<8x8xi32>
      %25 = vector.broadcast %23 : i32 to vector<8x8xi32>
      %26 = arith.addi %25, %24 : vector<8x8xi32>
      %c8_i32_14 = arith.constant 8 : i32
      %27 = arith.muli %arg2, %c8_i32_14 : i32
      %28 = tpu.iota {dimensions = array<i32: 1>} : vector<8x8xi32>
      %29 = vector.broadcast %27 : i32 to vector<8x8xi32>
      %30 = arith.addi %29, %28 : vector<8x8xi32>
      %31 = arith.cmpi sle, %30, %26 : vector<8x8xi32>
      %cst_15 = arith.constant -1.000000e+30 : f32
      %32 = vector.broadcast %cst_15 : f32 to vector<8x8xf32>
      %33 = arith.select %31, %22, %32 : vector<8x8xi1>, vector<8x8xf32>
      %c0_16 = arith.constant 0 : index
      %c0_17 = arith.constant 0 : index
      %34 = vector.load %arg7[%c0_16, %c0_17] : memref<8x1xf32, #tpu.memory_space<vmem>>, vector<8x1xf32>
      %cst_18 = arith.constant dense<0xFF800000> : vector<8xf32>
      %35 = vector.multi_reduction <maximumf>, %33, %cst_18 [1] : vector<8x8xf32> to vector<8xf32>
      %36 = vector.shape_cast %35 : vector<8xf32> to vector<8x1xf32>
      %37 = arith.maximumf %34, %36 : vector<8x1xf32>
      %38 = arith.subf %34, %37 : vector<8x1xf32>
      %39 = math.exp %38 : vector<8x1xf32>
      %40 = vector.broadcast %37 : vector<8x1xf32> to vector<8x8xf32>
      %41 = arith.subf %33, %40 : vector<8x8xf32>
      %42 = math.exp %41 : vector<8x8xf32>
      %c0_19 = arith.constant 0 : index
      %c0_20 = arith.constant 0 : index
      %43 = vector.load %arg8[%c0_19, %c0_20] : memref<8x1xf32, #tpu.memory_space<vmem>>, vector<8x1xf32>
      %44 = arith.mulf %39, %43 : vector<8x1xf32>
      %cst_21 = arith.constant dense<0.000000e+00> : vector<8xf32>
      %45 = vector.multi_reduction <add>, %42, %cst_21 [1] : vector<8x8xf32> to vector<8xf32>
      %46 = vector.shape_cast %45 : vector<8xf32> to vector<8x1xf32>
      %47 = arith.addf %44, %46 : vector<8x1xf32>
      %c0_22 = arith.constant 0 : index
      %c0_23 = arith.constant 0 : index
      %48 = vector.load %arg8[%c0_22, %c0_23] : memref<8x1xf32, #tpu.memory_space<vmem>>, vector<8x1xf32>
      tpu.vector_store %arg8[%c0_22, %c0_23], %47 {strides = array<i32>} : memref<8x1xf32, #tpu.memory_space<vmem>>, vector<8x1xf32>,
      %c0_24 = arith.constant 0 : index
      %c0_25 = arith.constant 0 : index
      %49 = vector.load %arg9[%c0_24, %c0_25] : memref<8x8xf32, #tpu.memory_space<vmem>>, vector<8x8xf32>
      %50 = vector.broadcast %39 : vector<8x1xf32> to vector<8x8xf32>
      %51 = arith.mulf %50, %49 : vector<8x8xf32>
      %52 = arith.truncf %42 : vector<8x8xf32> to vector<8x8xbf16>
      %cst_26 = arith.constant dense<0.000000e+00> : vector<8x8xf32>
      %53 = tpu.matmul %52, %21, %cst_26 {dimension_numbers = #tpu.dot_dimension_numbers<[1], [0], [0], [1], [0, 0, 1, 1], [], []>} : vector<8x8xbf16>, vector<8x8xbf16>, vector<8x8xf32> -> vector<8x8xf32>
      %54 = arith.addf %51, %53 : vector<8x8xf32>
      %c0_27 = arith.constant 0 : index
      %c0_28 = arith.constant 0 : index
      %55 = vector.load %arg9[%c0_27, %c0_28] : memref<8x8xf32, #tpu.memory_space<vmem>>, vector<8x8xf32>
      tpu.vector_store %arg9[%c0_27, %c0_28], %54 {strides = array<i32>} : memref<8x8xf32, #tpu.memory_space<vmem>>, vector<8x8xf32>,
      %c0_29 = arith.constant 0 : index
      %c0_30 = arith.constant 0 : index
      %56 = vector.load %arg7[%c0_29, %c0_30] : memref<8x1xf32, #tpu.memory_space<vmem>>, vector<8x1xf32>
      tpu.vector_store %arg7[%c0_29, %c0_30], %37 {strides = array<i32>} : memref<8x1xf32, #tpu.memory_space<vmem>>, vector<8x1xf32>,
    } else {
    }
    %c0_i32_3 = arith.constant 0 : i32
    %9 = arith.cmpi eq, %arg2, %c0_i32_3 : i32
    %10 = arith.extui %9 : i1 to i32
    %c0_i32_4 = arith.constant 0 : i32
    %11 = arith.cmpi ne, %10, %c0_i32_4 : i32
    scf.if %11 {
      %c0 = arith.constant 0 : index
      %c0_5 = arith.constant 0 : index
      %12 = vector.load %arg8[%c0, %c0_5] : memref<8x1xf32, #tpu.memory_space<vmem>>, vector<8x1xf32>
      %13 = tpu.reciprocal %12 {approx = true} : vector<8x1xf32> -> vector<8x1xf32>
      %c0_6 = arith.constant 0 : index
      %c0_7 = arith.constant 0 : index
      %14 = vector.load %arg9[%c0_6, %c0_7] : memref<8x8xf32, #tpu.memory_space<vmem>>, vector<8x8xf32>
      %15 = vector.broadcast %13 : vector<8x1xf32> to vector<8x8xf32>
      %16 = arith.mulf %14, %15 : vector<8x8xf32>
      %17 = arith.truncf %16 : vector<8x8xf32> to vector<8x8xbf16>
      %c0_8 = arith.constant 0 : index
      %c0_9 = arith.constant 0 : index
      %c0_10 = arith.constant 0 : index
      %18 = vector.load %arg6[%c0_8, %c0_9, %c0_10] : memref<1x8x8xbf16, #tpu.memory_space<vmem>>, vector<1x8x8xbf16>
      %19 = vector.shape_cast %18 : vector<1x8x8xbf16> to vector<8x8xbf16>
      %20 = vector.shape_cast %17 : vector<8x8xbf16> to vector<1x8x8xbf16>
      tpu.vector_store %arg6[%c0_8, %c0_9, %c0_10], %20 {strides = array<i32>} : memref<1x8x8xbf16, #tpu.memory_space<vmem>>, vector<1x8x8xbf16>,
    } else {
    }
    return
  }
  func.func @transform_0(%arg0: i32, %arg1: i32, %arg2: i32) -> (i32, i32, i32) {
    %c0_i32 = arith.constant 0 : i32
    %c0_i32_0 = arith.constant 0 : i32
    return %arg0, %arg1, %c0_i32 : i32, i32, i32
  }
  func.func @transform_1(%arg0: i32, %arg1: i32, %arg2: i32) -> (i32, i32, i32) {
    %0 = arith.minsi %arg2, %arg1 : i32
    %c0_i32 = arith.constant 0 : i32
    %c0_i32_0 = arith.constant 0 : i32
    return %arg0, %0, %c0_i32 : i32, i32, i32
  }
  func.func @transform_2(%arg0: i32, %arg1: i32, %arg2: i32) -> (i32, i32, i32) {
    %0 = arith.minsi %arg2, %arg1 : i32
    %c0_i32 = arith.constant 0 : i32
    %c0_i32_0 = arith.constant 0 : i32
    return %arg0, %0, %c0_i32 : i32, i32, i32
  }
  func.func @transform_3(%arg0: i32, %arg1: i32, %arg2: i32) -> (i32, i32, i32) {
    %c0_i32 = arith.constant 0 : i32
    %c0_i32_0 = arith.constant 0 : i32
    return %arg0, %arg1, %c0_i32 : i32, i32, i32
  }
}

module attributes {stable_mosaic.version = 11 : i64} {
  func.func @matmul_resid_kernel(%arg0: i32, %arg1: i32, %arg2: memref<16x32xbf16, #tpu.memory_space<vmem>>, %arg3: memref<16x32xf32, #tpu.memory_space<vmem>>, %arg4: memref<32x32xbf16, #tpu.memory_space<vmem>>, %arg5: memref<1x32xf32, #tpu.memory_space<vmem>>, %arg6: memref<16x32xf32, #tpu.memory_space<vmem>>) attributes {dimension_semantics = [#tpu.dimension_semantics<parallel>, #tpu.dimension_semantics<parallel>], iteration_bounds = array<i64: 1, 1>, scalar_prefetch = 0 : i64, scratch_operands = 0 : i64, tpu.core_type = #tpu.core_type<tc>, window_params = [{transform_indices = @transform_0, window_bounds = array<i64: 16, 32>}, {transform_indices = @transform_1, window_bounds = array<i64: 16, 32>}, {transform_indices = @transform_2, window_bounds = array<i64: 32, 32>}, {transform_indices = @transform_3, window_bounds = array<i64: 1, 32>}, {transform_indices = @transform_4, window_bounds = array<i64: 16, 32>}]} {
    %c0 = arith.constant 0 : index
    %c0_0 = arith.constant 0 : index
    %0 = vector.load %arg2[%c0, %c0_0] : memref<16x32xbf16, #tpu.memory_space<vmem>>, vector<16x32xbf16>
    %c0_1 = arith.constant 0 : index
    %c0_2 = arith.constant 0 : index
    %1 = vector.load %arg4[%c0_1, %c0_2] : memref<32x32xbf16, #tpu.memory_space<vmem>>, vector<32x32xbf16>
    %cst = arith.constant dense<0.000000e+00> : vector<16x32xf32>
    %2 = tpu.matmul %0, %1, %cst {dimension_numbers = #tpu.dot_dimension_numbers<[1], [0], [0], [1], [0, 0, 1, 1], [], []>} : vector<16x32xbf16>, vector<32x32xbf16>, vector<16x32xf32> -> vector<16x32xf32>
    %c0_3 = arith.constant 0 : index
    %c0_4 = arith.constant 0 : index
    %3 = vector.load %arg3[%c0_3, %c0_4] : memref<16x32xf32, #tpu.memory_space<vmem>>, vector<16x32xf32>
    %4 = arith.addf %3, %2 : vector<16x32xf32>
    %c0_5 = arith.constant 0 : index
    %c0_6 = arith.constant 0 : index
    %5 = vector.load %arg5[%c0_5, %c0_6] : memref<1x32xf32, #tpu.memory_space<vmem>>, vector<1x32xf32>
    %6 = vector.broadcast %5 : vector<1x32xf32> to vector<16x32xf32>
    %7 = arith.addf %4, %6 : vector<16x32xf32>
    %c0_7 = arith.constant 0 : index
    %c0_8 = arith.constant 0 : index
    %8 = vector.load %arg6[%c0_7, %c0_8] : memref<16x32xf32, #tpu.memory_space<vmem>>, vector<16x32xf32>
    tpu.vector_store %arg6[%c0_7, %c0_8], %7 {strides = array<i32>} : memref<16x32xf32, #tpu.memory_space<vmem>>, vector<16x32xf32>,
    return
  }
  func.func @transform_0(%arg0: i32, %arg1: i32) -> (i32, i32) {
    %c0_i32 = arith.constant 0 : i32
    %c0_i32_0 = arith.constant 0 : i32
    return %arg0, %c0_i32 : i32, i32
  }
  func.func @transform_1(%arg0: i32, %arg1: i32) -> (i32, i32) {
    %c0_i32 = arith.constant 0 : i32
    return %arg0, %arg1 : i32, i32
  }
  func.func @transform_2(%arg0: i32, %arg1: i32) -> (i32, i32) {
    %c0_i32 = arith.constant 0 : i32
    %c0_i32_0 = arith.constant 0 : i32
    return %c0_i32, %arg1 : i32, i32
  }
  func.func @transform_3(%arg0: i32, %arg1: i32) -> (i32, i32) {
    %c0_i32 = arith.constant 0 : i32
    %c0_i32_0 = arith.constant 0 : i32
    return %c0_i32, %arg1 : i32, i32
  }
  func.func @transform_4(%arg0: i32, %arg1: i32) -> (i32, i32) {
    %c0_i32 = arith.constant 0 : i32
    return %arg0, %arg1 : i32, i32
  }
}

module attributes {stable_mosaic.version = 11 : i64} {
  func.func @ln_matmul_kernel(%arg0: i32, %arg1: i32, %arg2: memref<16x32xf32, #tpu.memory_space<vmem>>, %arg3: memref<1x32xf32, #tpu.memory_space<vmem>>, %arg4: memref<1x32xf32, #tpu.memory_space<vmem>>, %arg5: memref<32x128xbf16, #tpu.memory_space<vmem>>, %arg6: memref<1x128xf32, #tpu.memory_space<vmem>>, %arg7: memref<16x128xbf16, #tpu.memory_space<vmem>>, %arg8: memref<16x32xbf16, #tpu.memory_space<vmem>>) attributes {dimension_semantics = [#tpu.dimension_semantics<parallel>, #tpu.dimension_semantics<arbitrary>], iteration_bounds = array<i64: 1, 1>, scalar_prefetch = 0 : i64, scratch_operands = 1 : i64, tpu.core_type = #tpu.core_type<tc>, window_params = [{transform_indices = @transform_0, window_bounds = array<i64: 16, 32>}, {pipeline_mode = #tpu.pipeline_mode<synchronous>, transform_indices = @transform_1, window_bounds = array<i64: 1, 32>}, {pipeline_mode = #tpu.pipeline_mode<synchronous>, transform_indices = @transform_2, window_bounds = array<i64: 1, 32>}, {transform_indices = @transform_3, window_bounds = array<i64: 32, 128>}, {transform_indices = @transform_4, window_bounds = array<i64: 1, 128>}, {transform_indices = @transform_5, window_bounds = array<i64: 16, 128>}]} {
    %c0_i32 = arith.constant 0 : i32
    %0 = arith.cmpi eq, %arg1, %c0_i32 : i32
    %1 = arith.extui %0 : i1 to i32
    %c0_i32_0 = arith.constant 0 : i32
    %2 = arith.cmpi ne, %1, %c0_i32_0 : i32
    scf.if %2 {
      %c0_11 = arith.constant 0 : index
      %c0_12 = arith.constant 0 : index
      %19 = vector.load %arg2[%c0_11, %c0_12] : memref<16x32xf32, #tpu.memory_space<vmem>>, vector<16x32xf32>
      %c0_13 = arith.constant 0 : index
      %c0_14 = arith.constant 0 : index
      %20 = vector.load %arg3[%c0_13, %c0_14] : memref<1x32xf32, #tpu.memory_space<vmem>>, vector<1x32xf32>
      %c0_15 = arith.constant 0 : index
      %c0_16 = arith.constant 0 : index
      %21 = vector.load %arg4[%c0_15, %c0_16] : memref<1x32xf32, #tpu.memory_space<vmem>>, vector<1x32xf32>
      %cst_17 = arith.constant dense<0.000000e+00> : vector<16xf32>
      %22 = vector.multi_reduction <add>, %19, %cst_17 [1] : vector<16x32xf32> to vector<16xf32>
      %23 = vector.shape_cast %22 : vector<16xf32> to vector<16x1xf32>
      %cst_18 = arith.constant 3.200000e+01 : f32
      %24 = vector.broadcast %cst_18 : f32 to vector<16x1xf32>
      %25 = arith.divf %23, %24 : vector<16x1xf32>
      %26 = vector.broadcast %25 : vector<16x1xf32> to vector<16x32xf32>
      %27 = arith.subf %19, %26 : vector<16x32xf32>
      %28 = arith.mulf %27, %27 : vector<16x32xf32>
      %cst_19 = arith.constant dense<0.000000e+00> : vector<16xf32>
      %29 = vector.multi_reduction <add>, %28, %cst_19 [1] : vector<16x32xf32> to vector<16xf32>
      %30 = vector.shape_cast %29 : vector<16xf32> to vector<16x1xf32>
      %cst_20 = arith.constant 3.200000e+01 : f32
      %31 = vector.broadcast %cst_20 : f32 to vector<16x1xf32>
      %32 = arith.divf %30, %31 : vector<16x1xf32>
      %33 = vector.broadcast %25 : vector<16x1xf32> to vector<16x32xf32>
      %34 = arith.subf %19, %33 : vector<16x32xf32>
      %cst_21 = arith.constant 9.99999974E-6 : f32
      %35 = vector.broadcast %cst_21 : f32 to vector<16x1xf32>
      %36 = arith.addf %32, %35 : vector<16x1xf32>
      %37 = math.rsqrt %36 : vector<16x1xf32>
      %38 = vector.broadcast %37 : vector<16x1xf32> to vector<16x32xf32>
      %39 = arith.mulf %34, %38 : vector<16x32xf32>
      %40 = vector.broadcast %20 : vector<1x32xf32> to vector<16x32xf32>
      %41 = arith.mulf %39, %40 : vector<16x32xf32>
      %42 = vector.broadcast %21 : vector<1x32xf32> to vector<16x32xf32>
      %43 = arith.addf %41, %42 : vector<16x32xf32>
      %44 = arith.truncf %43 : vector<16x32xf32> to vector<16x32xbf16>
      %c0_22 = arith.constant 0 : index
      %c0_23 = arith.constant 0 : index
      %45 = vector.load %arg8[%c0_22, %c0_23] : memref<16x32xbf16, #tpu.memory_space<vmem>>, vector<16x32xbf16>
      tpu.vector_store %arg8[%c0_22, %c0_23], %44 {strides = array<i32>} : memref<16x32xbf16, #tpu.memory_space<vmem>>, vector<16x32xbf16>,
    } else {
    }
    %c0 = arith.constant 0 : index
    %c0_1 = arith.constant 0 : index
    %3 = vector.load %arg8[%c0, %c0_1] : memref<16x32xbf16, #tpu.memory_space<vmem>>, vector<16x32xbf16>
    %c0_2 = arith.constant 0 : index
    %c0_3 = arith.constant 0 : index
    %4 = vector.load %arg5[%c0_2, %c0_3] : memref<32x128xbf16, #tpu.memory_space<vmem>>, vector<32x128xbf16>
    %cst = arith.constant dense<0.000000e+00> : vector<16x128xf32>
    %5 = tpu.matmul %3, %4, %cst {dimension_numbers = #tpu.dot_dimension_numbers<[1], [0], [0], [1], [0, 0, 1, 1], [], []>} : vector<16x32xbf16>, vector<32x128xbf16>, vector<16x128xf32> -> vector<16x128xf32>
    %c0_4 = arith.constant 0 : index
    %c0_5 = arith.constant 0 : index
    %6 = vector.load %arg6[%c0_4, %c0_5] : memref<1x128xf32, #tpu.memory_space<vmem>>, vector<1x128xf32>
    %7 = vector.broadcast %6 : vector<1x128xf32> to vector<16x128xf32>
    %8 = arith.addf %5, %7 : vector<16x128xf32>
    %cst_6 = arith.constant 5.000000e-01 : f32
    %9 = vector.broadcast %cst_6 : f32 to vector<16x128xf32>
    %10 = arith.mulf %9, %8 : vector<16x128xf32>
    %cst_7 = arith.constant 0.707106769 : f32
    %11 = vector.broadcast %cst_7 : f32 to vector<16x128xf32>
    %12 = arith.mulf %8, %11 : vector<16x128xf32>
    %13 = math.erf %12 : vector<16x128xf32>
    %cst_8 = arith.constant 1.000000e+00 : f32
    %14 = vector.broadcast %cst_8 : f32 to vector<16x128xf32>
    %15 = arith.addf %14, %13 : vector<16x128xf32>
    %16 = arith.mulf %10, %15 : vector<16x128xf32>
    %17 = arith.truncf %16 : vector<16x128xf32> to vector<16x128xbf16>
    %c0_9 = arith.constant 0 : index
    %c0_10 = arith.constant 0 : index
    %18 = vector.load %arg7[%c0_9, %c0_10] : memref<16x128xbf16, #tpu.memory_space<vmem>>, vector<16x128xbf16>
    tpu.vector_store %arg7[%c0_9, %c0_10], %17 {strides = array<i32>} : memref<16x128xbf16, #tpu.memory_space<vmem>>, vector<16x128xbf16>,
    return
  }
  func.func @transform_0(%arg0: i32, %arg1: i32) -> (i32, i32) {
    %c0_i32 = arith.constant 0 : i32
    %c0_i32_0 = arith.constant 0 : i32
    return %arg0, %c0_i32 : i32, i32
  }
  func.func @transform_1(%arg0: i32, %arg1: i32) -> (i32, i32) {
    %c0_i32 = arith.constant 0 : i32
    %c0_i32_0 = arith.constant 0 : i32
    %c0_i32_1 = arith.constant 0 : i32
    return %c0_i32, %c0_i32_0 : i32, i32
  }
  func.func @transform_2(%arg0: i32, %arg1: i32) -> (i32, i32) {
    %c0_i32 = arith.constant 0 : i32
    %c0_i32_0 = arith.constant 0 : i32
    %c0_i32_1 = arith.constant 0 : i32
    return %c0_i32, %c0_i32_0 : i32, i32
  }
  func.func @transform_3(%arg0: i32, %arg1: i32) -> (i32, i32) {
    %c0_i32 = arith.constant 0 : i32
    %c0_i32_0 = arith.constant 0 : i32
    return %c0_i32, %arg1 : i32, i32
  }
  func.func @transform_4(%arg0: i32, %arg1: i32) -> (i32, i32) {
    %c0_i32 = arith.constant 0 : i32
    %c0_i32_0 = arith.constant 0 : i32
    return %c0_i32, %arg1 : i32, i32
  }
  func.func @transform_5(%arg0: i32, %arg1: i32) -> (i32, i32) {
    %c0_i32 = arith.constant 0 : i32
    return %arg0, %arg1 : i32, i32
  }
}

module attributes {stable_mosaic.version = 11 : i64} {
  func.func @matmul_resid_kernel(%arg0: i32, %arg1: i32, %arg2: memref<16x128xbf16, #tpu.memory_space<vmem>>, %arg3: memref<16x32xf32, #tpu.memory_space<vmem>>, %arg4: memref<128x32xbf16, #tpu.memory_space<vmem>>, %arg5: memref<1x32xf32, #tpu.memory_space<vmem>>, %arg6: memref<16x32xf32, #tpu.memory_space<vmem>>) attributes {dimension_semantics = [#tpu.dimension_semantics<parallel>, #tpu.dimension_semantics<parallel>], iteration_bounds = array<i64: 1, 1>, scalar_prefetch = 0 : i64, scratch_operands = 0 : i64, tpu.core_type = #tpu.core_type<tc>, window_params = [{transform_indices = @transform_0, window_bounds = array<i64: 16, 128>}, {transform_indices = @transform_1, window_bounds = array<i64: 16, 32>}, {transform_indices = @transform_2, window_bounds = array<i64: 128, 32>}, {transform_indices = @transform_3, window_bounds = array<i64: 1, 32>}, {transform_indices = @transform_4, window_bounds = array<i64: 16, 32>}]} {
    %c0 = arith.constant 0 : index
    %c0_0 = arith.constant 0 : index
    %0 = vector.load %arg2[%c0, %c0_0] : memref<16x128xbf16, #tpu.memory_space<vmem>>, vector<16x128xbf16>
    %c0_1 = arith.constant 0 : index
    %c0_2 = arith.constant 0 : index
    %1 = vector.load %arg4[%c0_1, %c0_2] : memref<128x32xbf16, #tpu.memory_space<vmem>>, vector<128x32xbf16>
    %cst = arith.constant dense<0.000000e+00> : vector<16x32xf32>
    %2 = tpu.matmul %0, %1, %cst {dimension_numbers = #tpu.dot_dimension_numbers<[1], [0], [0], [1], [0, 0, 1, 1], [], []>} : vector<16x128xbf16>, vector<128x32xbf16>, vector<16x32xf32> -> vector<16x32xf32>
    %c0_3 = arith.constant 0 : index
    %c0_4 = arith.constant 0 : index
    %3 = vector.load %arg3[%c0_3, %c0_4] : memref<16x32xf32, #tpu.memory_space<vmem>>, vector<16x32xf32>
    %4 = arith.addf %3, %2 : vector<16x32xf32>
    %c0_5 = arith.constant 0 : index
    %c0_6 = arith.constant 0 : index
    %5 = vector.load %arg5[%c0_5, %c0_6] : memref<1x32xf32, #tpu.memory_space<vmem>>, vector<1x32xf32>
    %6 = vector.broadcast %5 : vector<1x32xf32> to vector<16x32xf32>
    %7 = arith.addf %4, %6 : vector<16x32xf32>
    %c0_7 = arith.constant 0 : index
    %c0_8 = arith.constant 0 : index
    %8 = vector.load %arg6[%c0_7, %c0_8] : memref<16x32xf32, #tpu.memory_space<vmem>>, vector<16x32xf32>
    tpu.vector_store %arg6[%c0_7, %c0_8], %7 {strides = array<i32>} : memref<16x32xf32, #tpu.memory_space<vmem>>, vector<16x32xf32>,
    return
  }
  func.func @transform_0(%arg0: i32, %arg1: i32) -> (i32, i32) {
    %c0_i32 = arith.constant 0 : i32
    %c0_i32_0 = arith.constant 0 : i32
    return %arg0, %c0_i32 : i32, i32
  }
  func.func @transform_1(%arg0: i32, %arg1: i32) -> (i32, i32) {
    %c0_i32 = arith.constant 0 : i32
    return %arg0, %arg1 : i32, i32
  }
  func.func @transform_2(%arg0: i32, %arg1: i32) -> (i32, i32) {
    %c0_i32 = arith.constant 0 : i32
    %c0_i32_0 = arith.constant 0 : i32
    return %c0_i32, %arg1 : i32, i32
  }
  func.func @transform_3(%arg0: i32, %arg1: i32) -> (i32, i32) {
    %c0_i32 = arith.constant 0 : i32
    %c0_i32_0 = arith.constant 0 : i32
    return %c0_i32, %arg1 : i32, i32
  }
  func.func @transform_4(%arg0: i32, %arg1: i32) -> (i32, i32) {
    %c0_i32 = arith.constant 0 : i32
    return %arg0, %arg1 : i32, i32
  }
}

module attributes {stable_mosaic.version = 11 : i64} {
  func.func @ln_head_kernel(%arg0: i32, %arg1: i32, %arg2: memref<16x32xf32, #tpu.memory_space<vmem>>, %arg3: memref<1x32xf32, #tpu.memory_space<vmem>>, %arg4: memref<1x32xf32, #tpu.memory_space<vmem>>, %arg5: memref<128x32xbf16, #tpu.memory_space<vmem>>, %arg6: memref<16x128xf32, #tpu.memory_space<vmem>>, %arg7: memref<16x32xbf16, #tpu.memory_space<vmem>>) attributes {dimension_semantics = [#tpu.dimension_semantics<parallel>, #tpu.dimension_semantics<arbitrary>], iteration_bounds = array<i64: 1, 1>, scalar_prefetch = 0 : i64, scratch_operands = 1 : i64, tpu.core_type = #tpu.core_type<tc>, window_params = [{transform_indices = @transform_0, window_bounds = array<i64: 16, 32>}, {pipeline_mode = #tpu.pipeline_mode<synchronous>, transform_indices = @transform_1, window_bounds = array<i64: 1, 32>}, {pipeline_mode = #tpu.pipeline_mode<synchronous>, transform_indices = @transform_2, window_bounds = array<i64: 1, 32>}, {transform_indices = @transform_3, window_bounds = array<i64: 128, 32>}, {transform_indices = @transform_4, window_bounds = array<i64: 16, 128>}]} {
    %c0_i32 = arith.constant 0 : i32
    %0 = arith.cmpi eq, %arg1, %c0_i32 : i32
    %1 = arith.extui %0 : i1 to i32
    %c0_i32_0 = arith.constant 0 : i32
    %2 = arith.cmpi ne, %1, %c0_i32_0 : i32
    scf.if %2 {
      %c0_6 = arith.constant 0 : index
      %c0_7 = arith.constant 0 : index
      %7 = vector.load %arg2[%c0_6, %c0_7] : memref<16x32xf32, #tpu.memory_space<vmem>>, vector<16x32xf32>
      %c0_8 = arith.constant 0 : index
      %c0_9 = arith.constant 0 : index
      %8 = vector.load %arg3[%c0_8, %c0_9] : memref<1x32xf32, #tpu.memory_space<vmem>>, vector<1x32xf32>
      %c0_10 = arith.constant 0 : index
      %c0_11 = arith.constant 0 : index
      %9 = vector.load %arg4[%c0_10, %c0_11] : memref<1x32xf32, #tpu.memory_space<vmem>>, vector<1x32xf32>
      %cst_12 = arith.constant dense<0.000000e+00> : vector<16xf32>
      %10 = vector.multi_reduction <add>, %7, %cst_12 [1] : vector<16x32xf32> to vector<16xf32>
      %11 = vector.shape_cast %10 : vector<16xf32> to vector<16x1xf32>
      %cst_13 = arith.constant 3.200000e+01 : f32
      %12 = vector.broadcast %cst_13 : f32 to vector<16x1xf32>
      %13 = arith.divf %11, %12 : vector<16x1xf32>
      %14 = vector.broadcast %13 : vector<16x1xf32> to vector<16x32xf32>
      %15 = arith.subf %7, %14 : vector<16x32xf32>
      %16 = arith.mulf %15, %15 : vector<16x32xf32>
      %cst_14 = arith.constant dense<0.000000e+00> : vector<16xf32>
      %17 = vector.multi_reduction <add>, %16, %cst_14 [1] : vector<16x32xf32> to vector<16xf32>
      %18 = vector.shape_cast %17 : vector<16xf32> to vector<16x1xf32>
      %cst_15 = arith.constant 3.200000e+01 : f32
      %19 = vector.broadcast %cst_15 : f32 to vector<16x1xf32>
      %20 = arith.divf %18, %19 : vector<16x1xf32>
      %21 = vector.broadcast %13 : vector<16x1xf32> to vector<16x32xf32>
      %22 = arith.subf %7, %21 : vector<16x32xf32>
      %cst_16 = arith.constant 9.99999974E-6 : f32
      %23 = vector.broadcast %cst_16 : f32 to vector<16x1xf32>
      %24 = arith.addf %20, %23 : vector<16x1xf32>
      %25 = math.rsqrt %24 : vector<16x1xf32>
      %26 = vector.broadcast %25 : vector<16x1xf32> to vector<16x32xf32>
      %27 = arith.mulf %22, %26 : vector<16x32xf32>
      %28 = vector.broadcast %8 : vector<1x32xf32> to vector<16x32xf32>
      %29 = arith.mulf %27, %28 : vector<16x32xf32>
      %30 = vector.broadcast %9 : vector<1x32xf32> to vector<16x32xf32>
      %31 = arith.addf %29, %30 : vector<16x32xf32>
      %32 = arith.truncf %31 : vector<16x32xf32> to vector<16x32xbf16>
      %c0_17 = arith.constant 0 : index
      %c0_18 = arith.constant 0 : index
      %33 = vector.load %arg7[%c0_17, %c0_18] : memref<16x32xbf16, #tpu.memory_space<vmem>>, vector<16x32xbf16>
      tpu.vector_store %arg7[%c0_17, %c0_18], %32 {strides = array<i32>} : memref<16x32xbf16, #tpu.memory_space<vmem>>, vector<16x32xbf16>,
    } else {
    }
    %c0 = arith.constant 0 : index
    %c0_1 = arith.constant 0 : index
    %3 = vector.load %arg7[%c0, %c0_1] : memref<16x32xbf16, #tpu.memory_space<vmem>>, vector<16x32xbf16>
    %c0_2 = arith.constant 0 : index
    %c0_3 = arith.constant 0 : index
    %4 = vector.load %arg5[%c0_2, %c0_3] : memref<128x32xbf16, #tpu.memory_space<vmem>>, vector<128x32xbf16>
    %cst = arith.constant dense<0.000000e+00> : vector<16x128xf32>
    %5 = tpu.matmul %3, %4, %cst {dimension_numbers = #tpu.dot_dimension_numbers<[1], [1], [0], [0], [0, 0, 1, 0], [], []>} : vector<16x32xbf16>, vector<128x32xbf16>, vector<16x128xf32> -> vector<16x128xf32>
    %c0_4 = arith.constant 0 : index
    %c0_5 = arith.constant 0 : index
    %6 = vector.load %arg6[%c0_4, %c0_5] : memref<16x128xf32, #tpu.memory_space<vmem>>, vector<16x128xf32>
    tpu.vector_store %arg6[%c0_4, %c0_5], %5 {strides = array<i32>} : memref<16x128xf32, #tpu.memory_space<vmem>>, vector<16x128xf32>,
    return
  }
  func.func @transform_0(%arg0: i32, %arg1: i32) -> (i32, i32) {
    %c0_i32 = arith.constant 0 : i32
    %c0_i32_0 = arith.constant 0 : i32
    return %arg0, %c0_i32 : i32, i32
  }
  func.func @transform_1(%arg0: i32, %arg1: i32) -> (i32, i32) {
    %c0_i32 = arith.constant 0 : i32
    %c0_i32_0 = arith.constant 0 : i32
    %c0_i32_1 = arith.constant 0 : i32
    return %c0_i32, %c0_i32_0 : i32, i32
  }
  func.func @transform_2(%arg0: i32, %arg1: i32) -> (i32, i32) {
    %c0_i32 = arith.constant 0 : i32
    %c0_i32_0 = arith.constant 0 : i32
    %c0_i32_1 = arith.constant 0 : i32
    return %c0_i32, %c0_i32_0 : i32, i32
  }
  func.func @transform_3(%arg0: i32, %arg1: i32) -> (i32, i32) {
    %c0_i32 = arith.constant 0 : i32
    %c0_i32_0 = arith.constant 0 : i32
    return %arg1, %c0_i32 : i32, i32
  }
  func.func @transform_4(%arg0: i32, %arg1: i32) -> (i32, i32) {
    %c0_i32 = arith.constant 0 : i32
    return %arg0, %arg1 : i32, i32
  }
}

</mosaic_0001>

<llo_original>
// kernel: _lambda_.13
$region0: #{_lambda_.13}
  #allocation0 [shape = 'u32[]', space=smem, size = 0x4, offset = 0x4, fixed_abs, tag = 'smem constant byte address 0x4 - core index']
  #allocation1 [shape = 'u32[144,128]{1,0:T(1,128)}', space=vmem, size = 0x12000, scoped, tag = 'internal scratch']
  %s0 = inlined_call_operand.vmem [shape: bf16[16,32], index: 0, kind: input, shape index: {}]
  %s1 = inlined_call_operand.vmem [shape: f32[16,32], index: 1, kind: input, shape index: {}]
  %s2 = inlined_call_operand.vmem [shape: bf16[32,32], index: 2, kind: input, shape index: {}]
  %s3 = inlined_call_operand.vmem [shape: f32[1,32], index: 3, kind: input, shape index: {}]
  %s4 = inlined_call_operand.vmem [shape: f32[16,32], index: 4, kind: output, shape index: {}]
  %s5 = sld [smem:[#allocation0]]
  $region26: #{_lambda_.13} parent=0
    _
  %s7 = ssub.s32 1, %s5
  %s8 = scalar_select 0, %s7, %s5
  // Predicated region
  $region2: #{_lambda_.13} parent=0 // pred_check
    _
  $region3: #{_lambda_.13} parent=0 // pred_check_branch
    %10 = sbr.rel (0) target = $region5
  $region4: #{_lambda_.13} parent=0 // pred_region
    _
  $region5: #{_lambda_.13} parent=0 // pred_fallthru
    _
  // Predicated region
  $region6: #{_lambda_.13} parent=0 // pred_check
    _
  $region7: #{_lambda_.13} parent=0 // pred_check_branch
    %12 = sbr.rel (0) target = $region9
  $region8: #{_lambda_.13} parent=0 // pred_region
    _
  $region9: #{_lambda_.13} parent=0 // pred_fallthru
    _
  // Predicated region
  $region10: #{_lambda_.13} parent=0 // pred_check
    _
  $region11: #{_lambda_.13} parent=0 // pred_check_branch
    %14 = sbr.rel (0) target = $region13
  $region12: #{_lambda_.13} parent=0 // pred_region
    _
  $region13: #{_lambda_.13} parent=0 // pred_fallthru
    _
  // Predicated region
  $region14: #{_lambda_.13} parent=0 // pred_check
    _
  $region15: #{_lambda_.13} parent=0 // pred_check_branch
    %16 = sbr.rel (0) target = $region17
  $region16: #{_lambda_.13} parent=0 // pred_region
    _
  $region17: #{_lambda_.13} parent=0 // pred_fallthru
    _
  %v18 = vld [vmem:[%s0] sm:$0xf]
  %v19 = vld [vmem:[%s0 + $0x4] sm:$0xf]
  %v20 = vld [vmem:[%s2] sm:$0xf]
  %v21 = vld [vmem:[%s2 + $0x4] sm:$0xf]
  %v22 = vld [vmem:[%s2 + $0x8] sm:$0xf]
  %v23 = vld [vmem:[%s2 + $0xc] sm:$0xf]
  %v26 = vunpack.c.l.b16 %v18
  %v27 = vunpack.c.l.b16 %v19
  %v28 = vpack.c.b16 %v27, %v26
  %v33 = vunpack.c.l.b16 %v20
  %v34 = vunpack.c.l.b16 %v21
  %v35 = vunpack.c.l.b16 %v22
  %v36 = vunpack.c.l.b16 %v23
  %v37 = vpack.c.b16 %v34, %v33
  %v38 = vpack.c.b16 %v36, %v35
  %vm41 = vcmask 261120
  %v43 = vsel %vm41, %v28, 0
  %45 = vmatprep.subr.bf16.mxu0 0
  %46 = vmatpush1.bf16.msra.mxu0 %v37
  %47 = vmatprep.subr.bf16.mxu0 0
  %48 = vmatpush1.bf16.msra.mxu0 %v38
  %49 = vmatprep.subr.bf16.mxu0 0
  %50 = vmatpush1.bf16.msra.mxu0 0
  %51 = vmatprep.subr.bf16.mxu0 0
  %52 = vmatpush1.bf16.msra.mxu0 0
  %53 = vmatprep.subr.bf16.mxu0 0
  %54 = vmatpush1.bf16.msra.mxu0 0
  %55 = vmatprep.subr.bf16.mxu0 0
  %56 = vmatpush1.bf16.msra.mxu0 0
  %57 = vmatprep.subr.bf16.mxu0 0
  %58 = vmatpush1.bf16.msra.mxu0 0
  %59 = vmatprep.subr.bf16.mxu0 0
  %60 = vmatpush1.bf16.msra.mxu0 0
  %61 = vmatprep.subr.bf16.mxu0 0
  %62 = vmatpush1.bf16.msra.mxu0 0
  %63 = vmatprep.subr.bf16.mxu0 0
  %64 = vmatpush1.bf16.msra.mxu0 0
  %65 = vmatprep.subr.bf16.mxu0 0
  %66 = vmatpush1.bf16.msra.mxu0 0
  %67 = vmatprep.subr.bf16.mxu0 0
  %68 = vmatpush1.bf16.msra.mxu0 0
  %69 = vmatprep.subr.bf16.mxu0 0
  %70 = vmatpush1.bf16.msra.mxu0 0
  %71 = vmatprep.subr.bf16.mxu0 0
  %72 = vmatpush1.bf16.msra.mxu0 0
  %73 = vmatprep.subr.bf16.mxu0 0
  %74 = vmatpush1.bf16.msra.mxu0 0
  %75 = vmatprep.subr.bf16.mxu0 0
  %76 = vmatpush1.bf16.msra.mxu0 0
  %77 = vmatprep.mubr.bf16.mxu0 0
  %78 = vmatmul.mubr.bf16.gmra.mrb[0].mxu0 %v43
  %v79 = vpop.f32.mrb[0].mxu0
  %v80 = vadd.f32 0.0, %v79
  %v81 = vpop.f32.mrb[0].mxu0
  %v82 = vpop.f32.mrb[0].mxu0
  %v83 = vadd.f32 0.0, %v82
  %v84 = vpop.f32.mrb[0].mxu0
  %85 = vdwg.mxu0
  %v86 = vld [vmem:[%s1] sm:$0xff]
  %v87 = vld [vmem:[%s1 + $0x8] sm:$0xff]
  %v88 = vadd.f32 %v86, %v80
  %v89 = vadd.f32 %v87, %v83
  %v90 = vld [vmem:[%s3] sm:$0x1]
  %v92 = vlaneseq
  %v93 = vshrl.u32 %v92, 7
  %v94 = vsub.s32 0, %v93
  %v95 = vrot.slane %v90, %v94
  %v97 = vadd.f32 %v88, %v95
  %v98 = vadd.f32 %v89, %v95
  %99 = vst.msk [vmem:[%s4] sm:$0xff] %vm41, %v97
  %100 = vst.msk [vmem:[%s4 + $0x8] sm:$0xff] %vm41, %v98
  // Predicated region
  $region18: #{_lambda_.13} parent=0 // pred_check
    _
  $region19: #{_lambda_.13} parent=0 // pred_check_branch
    %102 = sbr.rel (0) target = $region21
  $region20: #{_lambda_.13} parent=0 // pred_region
    _
  $region21: #{_lambda_.13} parent=0 // pred_fallthru
    _
  // Predicated region
  $region22: #{_lambda_.13} parent=0 // pred_check
    _
  $region23: #{_lambda_.13} parent=0 // pred_check_branch
    %104 = sbr.rel (0) target = $region25
  $region24: #{_lambda_.13} parent=0 // pred_region
    _
  $region25: #{_lambda_.13} parent=0 // pred_fallthru
    _

// kernel: _lambda_.11
$region0: #{_lambda_.11}
  #allocation0 [shape = 'u32[]', space=smem, size = 0x4, offset = 0x4, fixed_abs, tag = 'smem constant byte address 0x4 - core index']
  #allocation1 [shape = 'u32[144,128]{1,0:T(1,128)}', space=vmem, size = 0x12000, scoped, tag = 'internal scratch']
  #allocation2 [shape = 'bf16[16,32]{1,0:T(16,128)(2,1)}', space=vmem, size = 0x1000, scoped, tag = 'scratch operand']
  %s0 = inlined_call_operand.vmem [shape: f32[16,32], index: 0, kind: input, shape index: {}]
  %s1 = inlined_call_operand.vmem [shape: f32[1,32], index: 1, kind: input, shape index: {}]
  %s2 = inlined_call_operand.vmem [shape: f32[1,32], index: 2, kind: input, shape index: {}]
  %s3 = inlined_call_operand.vmem [shape: bf16[32,96], index: 3, kind: input, shape index: {}]
  %s4 = inlined_call_operand.vmem [shape: f32[1,96], index: 4, kind: input, shape index: {}]
  %s5 = inlined_call_operand.vmem [shape: bf16[16,96], index: 5, kind: output, shape index: {}]
  %s6 = sld [smem:[#allocation0]]
  $region34: #{_lambda_.11} parent=0
    _
  %s8 = ssub.s32 1, %s6
  %s9 = scalar_select 0, %s8, %s6
  // Predicated region
  $region2: #{_lambda_.11} parent=0 // pred_check
    _
  $region3: #{_lambda_.11} parent=0 // pred_check_branch
    %11 = sbr.rel (0) target = $region5
  $region4: #{_lambda_.11} parent=0 // pred_region
    _
  $region5: #{_lambda_.11} parent=0 // pred_fallthru
    _
  // Predicated region
  $region6: #{_lambda_.11} parent=0 // pred_check
    _
  $region7: #{_lambda_.11} parent=0 // pred_check_branch
    %13 = sbr.rel (0) target = $region9
  $region8: #{_lambda_.11} parent=0 // pred_region
    _
  $region9: #{_lambda_.11} parent=0 // pred_fallthru
    _
  // Predicated region
  $region10: #{_lambda_.11} parent=0 // pred_check
    _
  $region11: #{_lambda_.11} parent=0 // pred_check_branch
    %15 = sbr.rel (0) target = $region13
  $region12: #{_lambda_.11} parent=0 // pred_region
    _
  $region13: #{_lambda_.11} parent=0 // pred_fallthru
    _
  // Predicated region
  $region14: #{_lambda_.11} parent=0 // pred_check
    _
  $region15: #{_lambda_.11} parent=0 // pred_check_branch
    %17 = sbr.rel (0) target = $region17
  $region16: #{_lambda_.11} parent=0 // pred_region
    _
  $region17: #{_lambda_.11} parent=0 // pred_fallthru
    _
  // Predicated region
  $region18: #{_lambda_.11} parent=0 // pred_check
    _
  $region19: #{_lambda_.11} parent=0 // pred_check_branch
    %19 = sbr.rel (0) target = $region21
  $region20: #{_lambda_.11} parent=0 // pred_region
    _
  $region21: #{_lambda_.11} parent=0 // pred_fallthru
    _
  %p21 = scmp.eq.s32.totalorder 0, 0
  // Predicated region
  $region22: #{_lambda_.11} parent=0 // pred_check
    %p22 = pneg %p21
  $region23: #{_lambda_.11} parent=0 // pred_check_branch
    %24 = sbr.rel (%p22) target = $region25
  $region24: #{_lambda_.11} parent=0 // pred_region
    %v25 = vld [vmem:[%s0] sm:$0xff]
    %v26 = vld [vmem:[%s0 + $0x8] sm:$0xff]
    %v27 = vld [vmem:[%s1] sm:$0x1]
    %v28 = vld [vmem:[%s2] sm:$0x1]
    %vm29 = vcmask 261120
    %v30 = vsel %vm29, %v25, 0.0
    %31 = vadd.xlane.f32.xlu0 %v30
    %v32 = vpop.xlane.xlu0 %31
    %v33 = vsel %vm29, %v26, 0.0
    %34 = vadd.xlane.f32.xlu0 %v33
    %v35 = vpop.xlane.xlu0 %34
    %v36 = vrcp.pop 32.0
    %v37 = vmul.f32 %v32, %v36
    %v38 = vmul.f32 %v35, %v36
    %v39 = vsub.f32 %v25, %v37
    %v40 = vsub.f32 %v26, %v38
    %v41 = vmul.f32 %v39, %v39
    %v42 = vmul.f32 %v40, %v40
    %v43 = vsel %vm29, %v41, 0.0
    %44 = vadd.xlane.f32.xlu0 %v43
    %v45 = vpop.xlane.xlu0 %44
    %v46 = vsel %vm29, %v42, 0.0
    %47 = vadd.xlane.f32.xlu0 %v46
    %v48 = vpop.xlane.xlu0 %47
    %v49 = vmul.f32 %v45, %v36
    %v50 = vmul.f32 %v48, %v36
    %v51 = vadd.f32 %v49, 1e-05
    %v52 = vadd.f32 %v50, 1e-05
    %v53 = vrsqrt.pop %v51
    %v54 = vrsqrt.pop %v52
    %v55 = vmul.f32 %v39, %v53
    %v56 = vmul.f32 %v40, %v54
    %v58 = vlaneseq
    %v59 = vshrl.u32 %v58, 7
    %v60 = vsub.s32 0, %v59
    %v61 = vrot.slane %v27, %v60
    %v63 = vmul.f32 %v55, %v61
    %v64 = vmul.f32 %v56, %v61
    %v66 = vlaneseq
    %v67 = vshrl.u32 %v66, 7
    %v68 = vsub.s32 0, %v67
    %v69 = vrot.slane %v28, %v68
    %v71 = vadd.f32 %v63, %v69
    %v72 = vadd.f32 %v64, %v69
    %v73 = vpack.c.bf16 %v72, %v71
    %74 = vst.msk [vmem:[#allocation2] sm:$0xff] %vm29, %v73
  $region25: #{_lambda_.11} parent=0 // pred_fallthru
    _
  %v75 = vld [vmem:[#allocation2] sm:$0xff]
  %v76 = vld [vmem:[%s3] sm:$0xf]
  %v77 = vld [vmem:[%s3 + $0x4] sm:$0xf]
  %v78 = vld [vmem:[%s3 + $0x8] sm:$0xf]
  %v79 = vld [vmem:[%s3 + $0xc] sm:$0xf]
  %v80 = vld [vmem:[%s4] sm:$0x1]
  %v82 = vlaneseq
  %v83 = vshrl.u32 %v82, 7
  %v84 = vsub.s32 0, %v83
  %v85 = vrot.slane %v80, %v84
  %v91 = vunpack.c.l.b16 %v76
  %v92 = vunpack.c.l.b16 %v77
  %v93 = vunpack.c.l.b16 %v78
  %v94 = vunpack.c.l.b16 %v79
  %v95 = vpack.c.b16 %v92, %v91
  %v96 = vpack.c.b16 %v94, %v93
  %vm99 = vcmask 261120
  %v101 = vsel %vm99, %v75, 0
  %103 = vmatprep.subr.bf16.mxu0 0
  %104 = vmatpush1.bf16.msra.mxu0 %v95
  %105 = vmatprep.subr.bf16.mxu0 0
  %106 = vmatpush1.bf16.msra.mxu0 %v96
  %107 = vmatprep.subr.bf16.mxu0 0
  %108 = vmatpush1.bf16.msra.mxu0 0
  %109 = vmatprep.subr.bf16.mxu0 0
  %110 = vmatpush1.bf16.msra.mxu0 0
  %111 = vmatprep.subr.bf16.mxu0 0
  %112 = vmatpush1.bf16.msra.mxu0 0
  %113 = vmatprep.subr.bf16.mxu0 0
  %114 = vmatpush1.bf16.msra.mxu0 0
  %115 = vmatprep.subr.bf16.mxu0 0
  %116 = vmatpush1.bf16.msra.mxu0 0
  %117 = vmatprep.subr.bf16.mxu0 0
  %118 = vmatpush1.bf16.msra.mxu0 0
  %119 = vmatprep.subr.bf16.mxu0 0
  %120 = vmatpush1.bf16.msra.mxu0 0
  %121 = vmatprep.subr.bf16.mxu0 0
  %122 = vmatpush1.bf16.msra.mxu0 0
  %123 = vmatprep.subr.bf16.mxu0 0
  %124 = vmatpush1.bf16.msra.mxu0 0
  %125 = vmatprep.subr.bf16.mxu0 0
  %126 = vmatpush1.bf16.msra.mxu0 0
  %127 = vmatprep.subr.bf16.mxu0 0
  %128 = vmatpush1.bf16.msra.mxu0 0
  %129 = vmatprep.subr.bf16.mxu0 0
  %130 = vmatpush1.bf16.msra.mxu0 0
  %131 = vmatprep.subr.bf16.mxu0 0
  %132 = vmatpush1.bf16.msra.mxu0 0
  %133 = vmatprep.subr.bf16.mxu0 0
  %134 = vmatpush1.bf16.msra.mxu0 0
  %135 = vmatprep.mubr.bf16.mxu0 0
  %136 = vmatmul.mubr.bf16.gmra.mrb[0].mxu0 %v101
  %v137 = vpop.f32.mrb[0].mxu0
  %v138 = vadd.f32 %v85, %v137
  %v139 = vpop.f32.mrb[0].mxu0
  %v140 = vpop.f32.mrb[0].mxu0
  %v141 = vadd.f32 %v85, %v140
  %v142 = vpop.f32.mrb[0].mxu0
  %143 = vdwg.mxu0
  %v144 = vpack.c.bf16 %v141, %v138
  %v146 = vunpack.c.l.b16 %v144
  %v147 = vunpack.c.h.b16 %v144
  %v148 = vpack.c.b16 %v146, %v146
  %v149 = vpack.c.b16 %v147, %v147
  %vm152 = vcmask 781312
  %153 = vst.msk [vmem:[%s5] sm:$0xf] %vm152, %v148
  %154 = vst.msk [vmem:[%s5 + $0x4] sm:$0xf] %vm152, %v149
  // Predicated region
  $region26: #{_lambda_.11} parent=0 // pred_check
    _
  $region27: #{_lambda_.11} parent=0 // pred_check_branch
    %156 = sbr.rel (0) target = $region29
  $region28: #{_lambda_.11} parent=0 // pred_region
    _
  $region29: #{_lambda_.11} parent=0 // pred_fallthru
    _
  // Predicated region
  $region30: #{_lambda_.11} parent=0 // pred_check
    _
  $region31: #{_lambda_.11} parent=0 // pred_check_branch
    %158 = sbr.rel (0) target = $region33
  $region32: #{_lambda_.11} parent=0 // pred_region
    _
  $region33: #{_lambda_.11} parent=0 // pred_fallthru
    _

// kernel: _lambda_.12
$region0: #{_lambda_.12}
  #allocation0 [shape = 'u32[]', space=smem, size = 0x4, offset = 0x4, fixed_abs, tag = 'smem constant byte address 0x4 - core index']
  #allocation1 [shape = 'u32[144,128]{1,0:T(1,128)}', space=vmem, size = 0x12000, scoped, tag = 'internal scratch']
  #allocation2 [shape = 'f32[8,1]{1,0:T(8,128)}', space=vmem, size = 0x1000, scoped, tag = 'scratch operand']
  #allocation3 [shape = 'f32[8,1]{1,0:T(8,128)}', space=vmem, size = 0x1000, scoped, tag = 'scratch operand']
  #allocation4 [shape = 'f32[8,8]{1,0:T(8,128)}', space=vmem, size = 0x1000, scoped, tag = 'scratch operand']
  %s0 = inlined_call_operand.vmem [shape: bf16[8,8,8], index: 0, kind: input, shape index: {}]
  %s1 = inlined_call_operand.vmem [shape: bf16[8,8,8], index: 1, kind: input, shape index: {}]
  %s2 = inlined_call_operand.vmem [shape: bf16[8,8,8], index: 2, kind: input, shape index: {}]
  %s3 = inlined_call_operand.vmem [shape: bf16[8,8,8], index: 3, kind: output, shape index: {}]
  %s4 = sld [smem:[#allocation0]]
  $region61: #{_lambda_.12} parent=0
    _
  %s6 = ssub.s32 1, %s4
  %s7 = scalar_select 0, %s6, %s4
  loop: start=0, step=1, limit=10
  $region2: #{_lambda_.12} parent=0 // loop_pre_header
    _
  $region3: #{_lambda_.12} parent=0 // loop_header
    %s9 = sphi 0, %s13
    %p10 = scmp.ge.s32.totalorder %s9, 10
    %s16 = sphi 0, %s35
    %s17 = sphi 0, %s31
    %s18 = sphi 0, %s27
    %s19 = sphi 0, %s16
    %s20 = sphi 0, %s17
    %s21 = sphi 0, %s18
    %s22 = sphi 0, %s19
    %s23 = sphi 0, %s20
    %s24 = sphi 0, %s21
    %s40 = sphi 0, %s42
    %s43 = sphi 0, %s40
    %s44 = sphi 0, %s43
    %s60 = sphi 0, %s44
    %s72 = sphi 0, %s74
    %s75 = sphi 0, %s72
    %s76 = sphi 0, %s75
    %s92 = sphi 0, %s76
    %s104 = sphi 0, %s106
    %s107 = sphi 0, %s104
    %s108 = sphi 0, %s107
    %s124 = sphi 0, %s108
    %s132 = sphi 0, %s134
    %s135 = sphi 0, %s132
    %s136 = sphi 0, %s135
    %s152 = sphi 0, %s136
  $region4: #{_lambda_.12} parent=0 // loop_header_branch
    %12 = sbr.rel (%p10) target = $region8
  $region5: #{_lambda_.12} parent=0 // loop_body
    %s14 = ssub.s32 %s9, 1
    %s15 = ssub.s32 %s9, 2
    %s25 = sadd.s32 1, %s18
    %p26 = scmp.ge.s32.totalorder %s25, 1
    %s27 = scalar_select %p26, 0, %s25
    %s28 = sadd.s32 1, %s17
    %s29 = scalar_select %p26, %s28, %s17
    %p30 = scmp.ge.s32.totalorder %s29, 1
    %s31 = scalar_select %p30, 0, %s29
    %s32 = sadd.s32 1, %s16
    %s33 = scalar_select %p30, %s32, %s16
    %p34 = scmp.ge.s32.totalorder %s33, 8
    %s35 = scalar_select %p34, 0, %s33
    %s36 = ssub.s32 %s16, %s35
    %s37 = ssub.s32 %s17, %s31
    %s38 = sor.u32 %s36, %s37
    %p39 = scmp.eq.s32.totalorder %s38, 0
    %s41 = sadd.s32 %s40, 1
    %s42 = scalar_select %p39, %s40, %s41
    %p45 = pneg %p39
    %p46 = scmp.eq.s32.totalorder %s9, 7
    %p47 = por %p45, %p46
    %p48 = scmp.ne.s32.totalorder %s40, %s43
    %p49 = scmp.eq.s32.totalorder %s9, 0
    %p50 = por %p48, %p49
    %p51 = scmp.ne.s32.totalorder %s40, %s43
    %p52 = scmp.eq.s32.totalorder %s14, 7
    %p53 = por %p51, %p52
    %p54 = scmp.ne.s32.totalorder %s43, %s44
    %p55 = scmp.eq.s32.totalorder %s14, 0
    %p56 = por %p54, %p55
    %p57 = scmp.ne.s32.totalorder %s43, %s44
    %p58 = scmp.eq.s32.totalorder %s15, 7
    %p59 = por %p57, %p58
    %p61 = scmp.ne.s32.totalorder %s44, %s60
    %p62 = scmp.eq.s32.totalorder %s15, 0
    %p63 = por %p61, %p62
    %p64 = scmp.lt.s32.totalorder %s18, %s17
    %s65 = scalar_select %p64, %s18, %s17
    %p66 = scmp.lt.s32.totalorder %s27, %s31
    %s67 = scalar_select %p66, %s27, %s31
    %s68 = ssub.s32 %s16, %s35
    %s69 = ssub.s32 %s65, %s67
    %s70 = sor.u32 %s68, %s69
    %p71 = scmp.eq.s32.totalorder %s70, 0
    %s73 = sadd.s32 %s72, 1
    %s74 = scalar_select %p71, %s72, %s73
    %p77 = pneg %p71
    %p78 = scmp.eq.s32.totalorder %s9, 7
    %p79 = por %p77, %p78
    %p80 = scmp.ne.s32.totalorder %s72, %s75
    %p81 = scmp.eq.s32.totalorder %s9, 0
    %p82 = por %p80, %p81
    %p83 = scmp.ne.s32.totalorder %s72, %s75
    %p84 = scmp.eq.s32.totalorder %s14, 7
    %p85 = por %p83, %p84
    %p86 = scmp.ne.s32.totalorder %s75, %s76
    %p87 = scmp.eq.s32.totalorder %s14, 0
    %p88 = por %p86, %p87
    %p89 = scmp.ne.s32.totalorder %s75, %s76
    %p90 = scmp.eq.s32.totalorder %s15, 7
    %p91 = por %p89, %p90
    %p93 = scmp.ne.s32.totalorder %s76, %s92
    %p94 = scmp.eq.s32.totalorder %s15, 0
    %p95 = por %p93, %p94
    %p96 = scmp.lt.s32.totalorder %s18, %s17
    %s97 = scalar_select %p96, %s18, %s17
    %p98 = scmp.lt.s32.totalorder %s27, %s31
    %s99 = scalar_select %p98, %s27, %s31
    %s100 = ssub.s32 %s16, %s35
    %s101 = ssub.s32 %s97, %s99
    %s102 = sor.u32 %s100, %s101
    %p103 = scmp.eq.s32.totalorder %s102, 0
    %s105 = sadd.s32 %s104, 1
    %s106 = scalar_select %p103, %s104, %s105
    %p109 = pneg %p103
    %p110 = scmp.eq.s32.totalorder %s9, 7
    %p111 = por %p109, %p110
    %p112 = scmp.ne.s32.totalorder %s104, %s107
    %p113 = scmp.eq.s32.totalorder %s9, 0
    %p114 = por %p112, %p113
    %p115 = scmp.ne.s32.totalorder %s104, %s107
    %p116 = scmp.eq.s32.totalorder %s14, 7
    %p117 = por %p115, %p116
    %p118 = scmp.ne.s32.totalorder %s107, %s108
    %p119 = scmp.eq.s32.totalorder %s14, 0
    %p120 = por %p118, %p119
    %p121 = scmp.ne.s32.totalorder %s107, %s108
    %p122 = scmp.eq.s32.totalorder %s15, 7
    %p123 = por %p121, %p122
    %p125 = scmp.ne.s32.totalorder %s108, %s124
    %p126 = scmp.eq.s32.totalorder %s15, 0
    %p127 = por %p125, %p126
    %s128 = ssub.s32 %s16, %s35
    %s129 = ssub.s32 %s17, %s31
    %s130 = sor.u32 %s128, %s129
    %p131 = scmp.eq.s32.totalorder %s130, 0
    %s133 = sadd.s32 %s132, 1
    %s134 = scalar_select %p131, %s132, %s133
    %p137 = pneg %p131
    %p138 = scmp.eq.s32.totalorder %s9, 7
    %p139 = por %p137, %p138
    %p140 = scmp.ne.s32.totalorder %s132, %s135
    %p141 = scmp.eq.s32.totalorder %s9, 0
    %p142 = por %p140, %p141
    %p143 = scmp.ne.s32.totalorder %s132, %s135
    %p144 = scmp.eq.s32.totalorder %s14, 7
    %p145 = por %p143, %p144
    %p146 = scmp.ne.s32.totalorder %s135, %s136
    %p147 = scmp.eq.s32.totalorder %s14, 0
    %p148 = por %p146, %p147
    %p149 = scmp.ne.s32.totalorder %s135, %s136
    %p150 = scmp.eq.s32.totalorder %s15, 7
    %p151 = por %p149, %p150
    %p153 = scmp.ne.s32.totalorder %s136, %s152
    %p154 = scmp.eq.s32.totalorder %s15, 0
    %p155 = por %p153, %p154
    %p156 = scmp.le.s32.totalorder 1, %s9
    %p157 = scmp.lt.s32.totalorder %s9, 9
    %p158 = pnand %p156, %p157
    %p159 = pneg %p158
    // Predicated region
    $region9: #{_lambda_.12} parent=5 // pred_check
      _
    $region10: #{_lambda_.12} parent=5 // pred_check_branch
      %161 = sbr.rel (%p158) target = $region12
    $region11: #{_lambda_.12} parent=5 // pred_region
      %s162 = ssub.s32 %s9, 1
    $region12: #{_lambda_.12} parent=5 // pred_fallthru
      _
    %p163 = scmp.lt.s32.totalorder %s9, 8
    // Predicated region
    $region13: #{_lambda_.12} parent=5 // pred_check
      %p164 = pneg %p163
    $region14: #{_lambda_.12} parent=5 // pred_check_branch
      %166 = sbr.rel (%p164) target = $region16
    $region15: #{_lambda_.12} parent=5 // pred_region
      // Predicated region
      $region17: #{_lambda_.12} parent=15 // pred_check
        %p167 = pneg %p50
      $region18: #{_lambda_.12} parent=15 // pred_check_branch
        %169 = sbr.rel (%p167) target = $region20
      $region19: #{_lambda_.12} parent=15 // pred_region
        %p170 = scmp.lt.s32.totalorder %s16, 7
        %s171 = scalar_select %p170, %s16, 7
        %p172 = scmp.lt.s32.totalorder %s17, 0
        %s173 = scalar_select %p172, %s17, 0
        %s174 = sadd.s32 %s173, %s171
        %s175 = smul.addr %s174, 4
        %s176 = scalar_lea.vmem %s0, %s175
      $region20: #{_lambda_.12} parent=15 // pred_fallthru
        _
      // Predicated region
      $region21: #{_lambda_.12} parent=15 // pred_check
        %p177 = pneg %p82
      $region22: #{_lambda_.12} parent=15 // pred_check_branch
        %179 = sbr.rel (%p177) target = $region24
      $region23: #{_lambda_.12} parent=15 // pred_region
        %p180 = scmp.lt.s32.totalorder %s18, %s17
        %s181 = scalar_select %p180, %s18, %s17
        %p182 = scmp.lt.s32.totalorder %s16, 7
        %s183 = scalar_select %p182, %s16, 7
        %p184 = scmp.lt.s32.totalorder %s181, 0
        %s185 = scalar_select %p184, %s181, 0
        %s186 = sadd.s32 %s185, %s183
        %s187 = smul.addr %s186, 4
        %s188 = scalar_lea.vmem %s1, %s187
        %p189 = scmp.lt.s32.totalorder %s18, %s17
        %s190 = scalar_select %p189, %s18, %s17
      $region24: #{_lambda_.12} parent=15 // pred_fallthru
        _
      // Predicated region
      $region25: #{_lambda_.12} parent=15 // pred_check
        %p191 = pneg %p114
      $region26: #{_lambda_.12} parent=15 // pred_check_branch
        %193 = sbr.rel (%p191) target = $region28
      $region27: #{_lambda_.12} parent=15 // pred_region
        %p194 = scmp.lt.s32.totalorder %s18, %s17
        %s195 = scalar_select %p194, %s18, %s17
        %p196 = scmp.lt.s32.totalorder %s16, 7
        %s197 = scalar_select %p196, %s16, 7
        %p198 = scmp.lt.s32.totalorder %s195, 0
        %s199 = scalar_select %p198, %s195, 0
        %s200 = sadd.s32 %s199, %s197
        %s201 = smul.addr %s200, 4
        %s202 = scalar_lea.vmem %s2, %s201
        %p203 = scmp.lt.s32.totalorder %s18, %s17
        %s204 = scalar_select %p203, %s18, %s17
      $region28: #{_lambda_.12} parent=15 // pred_fallthru
        _
    $region16: #{_lambda_.12} parent=5 // pred_fallthru
      _
    %p205 = scmp.le.s32.totalorder 1, %s9
    %p206 = scmp.lt.s32.totalorder %s9, 9
    %p207 = pnand %p205, %p206
    %p208 = pneg %p207
    // Predicated region
    $region29: #{_lambda_.12} parent=5 // pred_check
      _
    $region30: #{_lambda_.12} parent=5 // pred_check_branch
      %210 = sbr.rel (%p207) target = $region32
    $region31: #{_lambda_.12} parent=5 // pred_region
      %s211 = ssub.s32 %s9, 1
      %p212 = scmp.lt.s32.totalorder %s19, 7
      %s213 = scalar_select %p212, %s19, 7
      %p214 = scmp.lt.s32.totalorder %s20, 0
      %s215 = scalar_select %p214, %s20, 0
      %s216 = sadd.s32 %s215, %s213
      %s217 = smul.addr %s216, 4
      %s218 = scalar_lea.vmem %s0, %s217
      %p219 = pneg %p56
      %p220 = pneg %p53
      %p221 = scmp.lt.s32.totalorder %s21, %s20
      %s222 = scalar_select %p221, %s21, %s20
      %p223 = scmp.lt.s32.totalorder %s19, 7
      %s224 = scalar_select %p223, %s19, 7
      %p225 = scmp.lt.s32.totalorder %s222, 0
      %s226 = scalar_select %p225, %s222, 0
      %s227 = sadd.s32 %s226, %s224
      %s228 = smul.addr %s227, 4
      %s229 = scalar_lea.vmem %s1, %s228
      %p230 = pneg %p88
      %p231 = pneg %p85
      %p232 = scmp.lt.s32.totalorder %s21, %s20
      %s233 = scalar_select %p232, %s21, %s20
      %p234 = scmp.lt.s32.totalorder %s19, 7
      %s235 = scalar_select %p234, %s19, 7
      %p236 = scmp.lt.s32.totalorder %s233, 0
      %s237 = scalar_select %p236, %s233, 0
      %s238 = sadd.s32 %s237, %s235
      %s239 = smul.addr %s238, 4
      %s240 = scalar_lea.vmem %s2, %s239
      %p241 = pneg %p120
      %p242 = pneg %p117
      %p243 = pneg %p148
      %p244 = pneg %p145
      %p245 = scmp.lt.s32.totalorder %s19, 7
      %s246 = scalar_select %p245, %s19, 7
      %p247 = scmp.lt.s32.totalorder %s20, 0
      %s248 = scalar_select %p247, %s20, 0
      %s249 = sadd.s32 %s248, %s246
      %s250 = smul.addr %s249, 4
      %s251 = scalar_lea.vmem %s3, %s250
      %p252 = scmp.lt.s32.totalorder %s19, 7
      %s253 = scalar_select %p252, %s19, 7
      %p254 = scmp.lt.s32.totalorder %s20, 0
      %s255 = scalar_select %p254, %s20, 0
      %s256 = sadd.s32 %s255, %s253
      %s257 = smul.addr %s256, 4
      %s258 = scalar_lea.vmem %s0, %s257
      %p259 = scmp.lt.s32.totalorder %s21, %s20
      %s260 = scalar_select %p259, %s21, %s20
      %p261 = scmp.lt.s32.totalorder %s19, 7
      %s262 = scalar_select %p261, %s19, 7
      %p263 = scmp.lt.s32.totalorder %s260, 0
      %s264 = scalar_select %p263, %s260, 0
      %s265 = sadd.s32 %s264, %s262
      %s266 = smul.addr %s265, 4
      %s267 = scalar_lea.vmem %s1, %s266
      %p268 = scmp.lt.s32.totalorder %s21, %s20
      %s269 = scalar_select %p268, %s21, %s20
      %p270 = scmp.lt.s32.totalorder %s21, %s20
      %s271 = scalar_select %p270, %s21, %s20
      %p272 = scmp.lt.s32.totalorder %s19, 7
      %s273 = scalar_select %p272, %s19, 7
      %p274 = scmp.lt.s32.totalorder %s271, 0
      %s275 = scalar_select %p274, %s271, 0
      %s276 = sadd.s32 %s275, %s273
      %s277 = smul.addr %s276, 4
      %s278 = scalar_lea.vmem %s2, %s277
      %p279 = scmp.lt.s32.totalorder %s21, %s20
      %s280 = scalar_select %p279, %s21, %s20
      %p281 = scmp.lt.s32.totalorder %s19, 7
      %s282 = scalar_select %p281, %s19, 7
      %p283 = scmp.lt.s32.totalorder %s20, 0
      %s284 = scalar_select %p283, %s20, 0
      %s285 = sadd.s32 %s284, %s282
      %s286 = smul.addr %s285, 4
      %s287 = scalar_lea.vmem %s3, %s286
      %p289 = scmp.eq.s32.totalorder %s21, 0
      // Predicated region
      $region33: #{_lambda_.12} parent=31 // pred_check
        %p290 = pneg %p289
      $region34: #{_lambda_.12} parent=31 // pred_check_branch
        %292 = sbr.rel (%p290) target = $region36
      $region35: #{_lambda_.12} parent=31 // pred_region
        %vm293 = vcmask 7168
        %294 = vst.msk [vmem:[#allocation2] sm:$0xff] %vm293, -inf
        %295 = vst.msk [vmem:[#allocation3] sm:$0xff] %vm293, 0.0
        %vm296 = vcmask 64512
        %297 = vst.msk [vmem:[#allocation4] sm:$0xff] %vm296, 0.0
      $region36: #{_lambda_.12} parent=31 // pred_fallthru
        _
      %p298 = scmp.lt.s32.totalorder %s21, %s20
      // Predicated region
      $region37: #{_lambda_.12} parent=31 // pred_check
        %p299 = pneg %p298
      $region38: #{_lambda_.12} parent=31 // pred_check_branch
        %301 = sbr.rel (%p299) target = $region40
      $region39: #{_lambda_.12} parent=31 // pred_region
        %v302 = vld [vmem:[%s258] sm:$0xf]
        %v303 = vunpack.c.l.bf16 %v302
        %v304 = vmul.f32 %v303, 0.35355338
        %v305 = vpack.c.bf16 %v304, %v304
        %v306 = vld [vmem:[%s267] sm:$0xf]
        %v307 = vld [vmem:[%s278] sm:$0xf]
        %vm308 = vcmask 64512
        %v310 = vsel %vm308, %v305, 0
        %v313 = vsel %vm308, %v306, 0
        %315 = vmatprep.subr.bf16.mxu0 0
        %316 = vmatpush1.bf16.xpose.msra.mxu0 %v313
        %317 = vmatprep.subr.bf16.mxu0 0
        %318 = vmatpush1.bf16.xpose.msra.mxu0 0
        %319 = vmatprep.subr.bf16.mxu0 0
        %320 = vmatpush1.bf16.xpose.msra.mxu0 0
        %321 = vmatprep.subr.bf16.mxu0 0
        %322 = vmatpush1.bf16.xpose.msra.mxu0 0
        %323 = vmatprep.subr.bf16.mxu0 0
        %324 = vmatpush1.bf16.xpose.msra.mxu0 0
        %325 = vmatprep.subr.bf16.mxu0 0
        %326 = vmatpush1.bf16.xpose.msra.mxu0 0
        %327 = vmatprep.subr.bf16.mxu0 0
        %328 = vmatpush1.bf16.xpose.msra.mxu0 0
        %329 = vmatprep.subr.bf16.mxu0 0
        %330 = vmatpush1.bf16.xpose.msra.mxu0 0
        %331 = vmatprep.subr.bf16.mxu0 0
        %332 = vmatpush1.bf16.xpose.msra.mxu0 0
        %333 = vmatprep.subr.bf16.mxu0 0
        %334 = vmatpush1.bf16.xpose.msra.mxu0 0
        %335 = vmatprep.subr.bf16.mxu0 0
        %336 = vmatpush1.bf16.xpose.msra.mxu0 0
        %337 = vmatprep.subr.bf16.mxu0 0
        %338 = vmatpush1.bf16.xpose.msra.mxu0 0
        %339 = vmatprep.subr.bf16.mxu0 0
        %340 = vmatpush1.bf16.xpose.msra.mxu0 0
        %341 = vmatprep.subr.bf16.mxu0 0
        %342 = vmatpush1.bf16.xpose.msra.mxu0 0
        %343 = vmatprep.subr.bf16.mxu0 0
        %344 = vmatpush1.bf16.xpose.msra.mxu0 0
        %345 = vmatprep.subr.bf16.mxu0 0
        %346 = vmatpush1.bf16.xpose.msra.mxu0 0
        %347 = vmatprep.mubr.bf16.mxu0 0
        %348 = vmatmul.mubr.bf16.gmra.mrb[0].mxu0 %v310
        %v349 = vpop.f32.mrb[0].mxu0
        %v350 = vadd.f32 0.0, %v349
        %v351 = vpop.f32.mrb[0].mxu0
        %v352 = vpop.f32.mrb[0].mxu0
        %v353 = vpop.f32.mrb[0].mxu0
        %354 = vdwg.mxu0
        %v355 = vld [vmem:[#allocation2] sm:$0xff]
        %v356 = vsel %vm308, %v350, -inf
        %357 = vmax.xlane.f32.xlu0 %v356
        %v358 = vpop.xlane.xlu0 %357
        %v359 = vmax.f32 %v355, %v358
        %v360 = vsub.f32 %v355, %v359
        %v361 = vmul.f32 %v360, 1.442695
        %v362 = vpow.pop %v361
        %364 = vset.pattern.permute.xlu0 0
        %365 = vperm.xlu0 %364, %v359
        %v366 = vpop.permute.xlu0 %365
        %v368 = vsub.f32 %v350, %v366
        %v369 = vmul.f32 %v368, 1.442695
        %v370 = vpow.pop %v369
        %v371 = vld [vmem:[#allocation3] sm:$0xff]
        %v372 = vmul.f32 %v362, %v371
        %v373 = vsel %vm308, %v370, 0.0
        %374 = vadd.xlane.f32.xlu0 %v373
        %v375 = vpop.xlane.xlu0 %374
        %v376 = vadd.f32 %v372, %v375
        %vm377 = vcmask 7168
        %378 = vst.msk [vmem:[#allocation3] sm:$0xff] %vm377, %v376
        %v379 = vld [vmem:[#allocation4] sm:$0xff]
        %381 = vset.pattern.permute.xlu0 0
        %382 = vperm.xlu0 %381, %v362
        %v383 = vpop.permute.xlu0 %382
        %v385 = vmul.f32 %v383, %v379
        %v386 = vpack.c.bf16 %v370, %v370
        %v388 = vsel %vm308, %v386, 0
        %vm390 = vcmask 1043456
        %v392 = vsel %vm390, %v307, 0
        %394 = vmatprep.subr.bf16.mxu0 0
        %395 = vmatpush1.bf16.msra.mxu0 %v392
        %396 = vmatprep.subr.bf16.mxu0 0
        %397 = vmatpush1.bf16.msra.mxu0 0
        %398 = vmatprep.subr.bf16.mxu0 0
        %399 = vmatpush1.bf16.msra.mxu0 0
        %400 = vmatprep.subr.bf16.mxu0 0
        %401 = vmatpush1.bf16.msra.mxu0 0
        %402 = vmatprep.subr.bf16.mxu0 0
        %403 = vmatpush1.bf16.msra.mxu0 0
        %404 = vmatprep.subr.bf16.mxu0 0
        %405 = vmatpush1.bf16.msra.mxu0 0
        %406 = vmatprep.subr.bf16.mxu0 0
        %407 = vmatpush1.bf16.msra.mxu0 0
        %408 = vmatprep.subr.bf16.mxu0 0
        %409 = vmatpush1.bf16.msra.mxu0 0
        %410 = vmatprep.subr.bf16.mxu0 0
        %411 = vmatpush1.bf16.msra.mxu0 0
        %412 = vmatprep.subr.bf16.mxu0 0
        %413 = vmatpush1.bf16.msra.mxu0 0
        %414 = vmatprep.subr.bf16.mxu0 0
        %415 = vmatpush1.bf16.msra.mxu0 0
        %416 = vmatprep.subr.bf16.mxu0 0
        %417 = vmatpush1.bf16.msra.mxu0 0
        %418 = vmatprep.subr.bf16.mxu0 0
        %419 = vmatpush1.bf16.msra.mxu0 0
        %420 = vmatprep.subr.bf16.mxu0 0
        %421 = vmatpush1.bf16.msra.mxu0 0
        %422 = vmatprep.subr.bf16.mxu0 0
        %423 = vmatpush1.bf16.msra.mxu0 0
        %424 = vmatprep.subr.bf16.mxu0 0
        %425 = vmatpush1.bf16.msra.mxu0 0
        %426 = vmatprep.mubr.bf16.mxu0 0
        %427 = vmatmul.mubr.bf16.gmra.mrb[0].mxu0 %v388
        %v428 = vpop.f32.mrb[0].mxu0
        %v429 = vadd.f32 0.0, %v428
        %v430 = vpop.f32.mrb[0].mxu0
        %v431 = vpop.f32.mrb[0].mxu0
        %v432 = vpop.f32.mrb[0].mxu0
        %433 = vdwg.mxu0
        %v434 = vadd.f32 %v385, %v429
        %435 = vst.msk [vmem:[#allocation4] sm:$0xff] %vm308, %v434
        %436 = vst.msk [vmem:[#allocation2] sm:$0xff] %vm377, %v359
      $region40: #{_lambda_.12} parent=31 // pred_fallthru
        _
      %p437 = scmp.eq.s32.totalorder %s21, %s20
      // Predicated region
      $region41: #{_lambda_.12} parent=31 // pred_check
        %p438 = pneg %p437
      $region42: #{_lambda_.12} parent=31 // pred_check_branch
        %440 = sbr.rel (%p438) target = $region44
      $region43: #{_lambda_.12} parent=31 // pred_region
        %v441 = vld [vmem:[%s258] sm:$0xf]
        %v442 = vunpack.c.l.bf16 %v441
        %v443 = vmul.f32 %v442, 0.35355338
        %v444 = vpack.c.bf16 %v443, %v443
        %v445 = vld [vmem:[%s267] sm:$0xf]
        %v446 = vld [vmem:[%s278] sm:$0xf]
        %vm447 = vcmask 64512
        %v449 = vsel %vm447, %v444, 0
        %v452 = vsel %vm447, %v445, 0
        %454 = vmatprep.subr.bf16.mxu0 0
        %455 = vmatpush1.bf16.xpose.msra.mxu0 %v452
        %456 = vmatprep.subr.bf16.mxu0 0
        %457 = vmatpush1.bf16.xpose.msra.mxu0 0
        %458 = vmatprep.subr.bf16.mxu0 0
        %459 = vmatpush1.bf16.xpose.msra.mxu0 0
        %460 = vmatprep.subr.bf16.mxu0 0
        %461 = vmatpush1.bf16.xpose.msra.mxu0 0
        %462 = vmatprep.subr.bf16.mxu0 0
        %463 = vmatpush1.bf16.xpose.msra.mxu0 0
        %464 = vmatprep.subr.bf16.mxu0 0
        %465 = vmatpush1.bf16.xpose.msra.mxu0 0
        %466 = vmatprep.subr.bf16.mxu0 0
        %467 = vmatpush1.bf16.xpose.msra.mxu0 0
        %468 = vmatprep.subr.bf16.mxu0 0
        %469 = vmatpush1.bf16.xpose.msra.mxu0 0
        %470 = vmatprep.subr.bf16.mxu0 0
        %471 = vmatpush1.bf16.xpose.msra.mxu0 0
        %472 = vmatprep.subr.bf16.mxu0 0
        %473 = vmatpush1.bf16.xpose.msra.mxu0 0
        %474 = vmatprep.subr.bf16.mxu0 0
        %475 = vmatpush1.bf16.xpose.msra.mxu0 0
        %476 = vmatprep.subr.bf16.mxu0 0
        %477 = vmatpush1.bf16.xpose.msra.mxu0 0
        %478 = vmatprep.subr.bf16.mxu0 0
        %479 = vmatpush1.bf16.xpose.msra.mxu0 0
        %480 = vmatprep.subr.bf16.mxu0 0
        %481 = vmatpush1.bf16.xpose.msra.mxu0 0
        %482 = vmatprep.subr.bf16.mxu0 0
        %483 = vmatpush1.bf16.xpose.msra.mxu0 0
        %484 = vmatprep.subr.bf16.mxu0 0
        %485 = vmatpush1.bf16.xpose.msra.mxu0 0
        %486 = vmatprep.mubr.bf16.mxu0 0
        %487 = vmatmul.mubr.bf16.gmra.mrb[0].mxu0 %v449
        %v488 = vpop.f32.mrb[0].mxu0
        %v489 = vadd.f32 0.0, %v488
        %v490 = vpop.f32.mrb[0].mxu0
        %v491 = vpop.f32.mrb[0].mxu0
        %v492 = vpop.f32.mrb[0].mxu0
        %493 = vdwg.mxu0
        %s494 = smul.u32 %s20, 8
        %v495 = vlaneseq
        %v496 = vshrl.u32 %v495, 7
        %v497 = vstv %s494
        %v498 = vadd.s32 %v497, %v496
        %s499 = smul.u32 %s21, 8
        %v500 = vlaneseq
        %v501 = vand.u32 %v500, 127
        %v502 = vstv %s499
        %v503 = vadd.s32 %v502, %v501
        %vm504 = vcmp.le.s32.totalorder %v503, %v498
        %v505 = vsel %vm504, %v489, -1e+30
        %v506 = vld [vmem:[#allocation2] sm:$0xff]
        %v507 = vsel %vm447, %v505, -inf
        %508 = vmax.xlane.f32.xlu0 %v507
        %v509 = vpop.xlane.xlu0 %508
        %v510 = vmax.f32 %v506, %v509
        %v511 = vsub.f32 %v506, %v510
        %v512 = vmul.f32 %v511, 1.442695
        %v513 = vpow.pop %v512
        %515 = vset.pattern.permute.xlu0 0
        %516 = vperm.xlu0 %515, %v510
        %v517 = vpop.permute.xlu0 %516
        %v519 = vsub.f32 %v505, %v517
        %v520 = vmul.f32 %v519, 1.442695
        %v521 = vpow.pop %v520
        %v522 = vld [vmem:[#allocation3] sm:$0xff]
        %v523 = vmul.f32 %v513, %v522
        %v524 = vsel %vm447, %v521, 0.0
        %525 = vadd.xlane.f32.xlu0 %v524
        %v526 = vpop.xlane.xlu0 %525
        %v527 = vadd.f32 %v523, %v526
        %vm528 = vcmask 7168
        %529 = vst.msk [vmem:[#allocation3] sm:$0xff] %vm528, %v527
        %v530 = vld [vmem:[#allocation4] sm:$0xff]
        %532 = vset.pattern.permute.xlu0 0
        %533 = vperm.xlu0 %532, %v513
        %v534 = vpop.permute.xlu0 %533
        %v536 = vmul.f32 %v534, %v530
        %v537 = vpack.c.bf16 %v521, %v521
        %v539 = vsel %vm447, %v537, 0
        %vm541 = vcmask 1043456
        %v543 = vsel %vm541, %v446, 0
        %545 = vmatprep.subr.bf16.mxu0 0
        %546 = vmatpush1.bf16.msra.mxu0 %v543
        %547 = vmatprep.subr.bf16.mxu0 0
        %548 = vmatpush1.bf16.msra.mxu0 0
        %549 = vmatprep.subr.bf16.mxu0 0
        %550 = vmatpush1.bf16.msra.mxu0 0
        %551 = vmatprep.subr.bf16.mxu0 0
        %552 = vmatpush1.bf16.msra.mxu0 0
        %553 = vmatprep.subr.bf16.mxu0 0
        %554 = vmatpush1.bf16.msra.mxu0 0
        %555 = vmatprep.subr.bf16.mxu0 0
        %556 = vmatpush1.bf16.msra.mxu0 0
        %557 = vmatprep.subr.bf16.mxu0 0
        %558 = vmatpush1.bf16.msra.mxu0 0
        %559 = vmatprep.subr.bf16.mxu0 0
        %560 = vmatpush1.bf16.msra.mxu0 0
        %561 = vmatprep.subr.bf16.mxu0 0
        %562 = vmatpush1.bf16.msra.mxu0 0
        %563 = vmatprep.subr.bf16.mxu0 0
        %564 = vmatpush1.bf16.msra.mxu0 0
        %565 = vmatprep.subr.bf16.mxu0 0
        %566 = vmatpush1.bf16.msra.mxu0 0
        %567 = vmatprep.subr.bf16.mxu0 0
        %568 = vmatpush1.bf16.msra.mxu0 0
        %569 = vmatprep.subr.bf16.mxu0 0
        %570 = vmatpush1.bf16.msra.mxu0 0
        %571 = vmatprep.subr.bf16.mxu0 0
        %572 = vmatpush1.bf16.msra.mxu0 0
        %573 = vmatprep.subr.bf16.mxu0 0
        %574 = vmatpush1.bf16.msra.mxu0 0
        %575 = vmatprep.subr.bf16.mxu0 0
        %576 = vmatpush1.bf16.msra.mxu0 0
        %577 = vmatprep.mubr.bf16.mxu0 0
        %578 = vmatmul.mubr.bf16.gmra.mrb[0].mxu0 %v539
        %v579 = vpop.f32.mrb[0].mxu0
        %v580 = vadd.f32 0.0, %v579
        %v581 = vpop.f32.mrb[0].mxu0
        %v582 = vpop.f32.mrb[0].mxu0
        %v583 = vpop.f32.mrb[0].mxu0
        %584 = vdwg.mxu0
        %v585 = vadd.f32 %v536, %v580
        %586 = vst.msk [vmem:[#allocation4] sm:$0xff] %vm447, %v585
        %587 = vst.msk [vmem:[#allocation2] sm:$0xff] %vm528, %v510
      $region44: #{_lambda_.12} parent=31 // pred_fallthru
        _
      // Predicated region
      $region45: #{_lambda_.12} parent=31 // pred_check
        %p588 = pneg %p289
      $region46: #{_lambda_.12} parent=31 // pred_check_branch
        %590 = sbr.rel (%p588) target = $region48
      $region47: #{_lambda_.12} parent=31 // pred_region
        %v591 = vld [vmem:[#allocation3] sm:$0xff]
        %v592 = vrcp.pop %v591
        %v593 = vld [vmem:[#allocation4] sm:$0xff]
        %595 = vset.pattern.permute.xlu0 0
        %596 = vperm.xlu0 %595, %v592
        %v597 = vpop.permute.xlu0 %596
        %v599 = vmul.f32 %v593, %v597
        %v600 = vpack.c.bf16 %v599, %v599
        %vm601 = vcmask 60416
        %602 = vst.msk [vmem:[%s287] sm:$0xf] %vm601, %v600
      $region48: #{_lambda_.12} parent=31 // pred_fallthru
        _
      %p603 = scmp.lt.s32.totalorder %s19, 7
      %s604 = scalar_select %p603, %s19, 7
      %p605 = scmp.lt.s32.totalorder %s20, 0
      %s606 = scalar_select %p605, %s20, 0
      %s607 = sadd.s32 %s606, %s604
      %s608 = smul.addr %s607, 4
      %s609 = scalar_lea.vmem %s3, %s608
      // Predicated region
      $region49: #{_lambda_.12} parent=31 // pred_check
        %p610 = pneg %p145
      $region50: #{_lambda_.12} parent=31 // pred_check_branch
        %612 = sbr.rel (%p610) target = $region52
      $region51: #{_lambda_.12} parent=31 // pred_region
        _
      $region52: #{_lambda_.12} parent=31 // pred_fallthru
        _
    $region32: #{_lambda_.12} parent=5 // pred_fallthru
      _
    %p613 = scmp.le.s32.totalorder 2, %s9
    // Predicated region
    $region53: #{_lambda_.12} parent=5 // pred_check
      %p614 = pneg %p613
    $region54: #{_lambda_.12} parent=5 // pred_check_branch
      %616 = sbr.rel (%p614) target = $region56
    $region55: #{_lambda_.12} parent=5 // pred_region
      %s617 = ssub.s32 %s9, 2
      // Predicated region
      $region57: #{_lambda_.12} parent=55 // pred_check
        %p618 = pneg %p151
      $region58: #{_lambda_.12} parent=55 // pred_check_branch
        %620 = sbr.rel (%p618) target = $region60
      $region59: #{_lambda_.12} parent=55 // pred_region
        %p621 = scmp.lt.s32.totalorder %s22, 7
        %s622 = scalar_select %p621, %s22, 7
        %p623 = scmp.lt.s32.totalorder %s23, 0
        %s624 = scalar_select %p623, %s23, 0
        %s625 = sadd.s32 %s624, %s622
        %s626 = smul.addr %s625, 4
        %s627 = scalar_lea.vmem %s3, %s626
      $region60: #{_lambda_.12} parent=55 // pred_fallthru
        _
    $region56: #{_lambda_.12} parent=5 // pred_fallthru
      _
  $region6: #{_lambda_.12} parent=0 // loop_footer
    %s13 = sadd.s32 1, %s9
  $region7: #{_lambda_.12} parent=0 // loop_footer_branch
    %8 = sbr.rel target = $region3
  $region8: #{_lambda_.12} parent=0 // loop_exit
    _

// kernel: _lambda_.14
$region0: #{_lambda_.14}
  #allocation0 [shape = 'u32[]', space=smem, size = 0x4, offset = 0x4, fixed_abs, tag = 'smem constant byte address 0x4 - core index']
  #allocation1 [shape = 'u32[144,128]{1,0:T(1,128)}', space=vmem, size = 0x12000, scoped, tag = 'internal scratch']
  #allocation2 [shape = 'bf16[16,32]{1,0:T(16,128)(2,1)}', space=vmem, size = 0x1000, scoped, tag = 'scratch operand']
  %s0 = inlined_call_operand.vmem [shape: f32[16,32], index: 0, kind: input, shape index: {}]
  %s1 = inlined_call_operand.vmem [shape: f32[1,32], index: 1, kind: input, shape index: {}]
  %s2 = inlined_call_operand.vmem [shape: f32[1,32], index: 2, kind: input, shape index: {}]
  %s3 = inlined_call_operand.vmem [shape: bf16[32,128], index: 3, kind: input, shape index: {}]
  %s4 = inlined_call_operand.vmem [shape: f32[1,128], index: 4, kind: input, shape index: {}]
  %s5 = inlined_call_operand.vmem [shape: bf16[16,128], index: 5, kind: output, shape index: {}]
  %s6 = sld [smem:[#allocation0]]
  $region34: #{_lambda_.14} parent=0
    _
  %s8 = ssub.s32 1, %s6
  %s9 = scalar_select 0, %s8, %s6
  // Predicated region
  $region2: #{_lambda_.14} parent=0 // pred_check
    _
  $region3: #{_lambda_.14} parent=0 // pred_check_branch
    %11 = sbr.rel (0) target = $region5
  $region4: #{_lambda_.14} parent=0 // pred_region
    _
  $region5: #{_lambda_.14} parent=0 // pred_fallthru
    _
  // Predicated region
  $region6: #{_lambda_.14} parent=0 // pred_check
    _
  $region7: #{_lambda_.14} parent=0 // pred_check_branch
    %13 = sbr.rel (0) target = $region9
  $region8: #{_lambda_.14} parent=0 // pred_region
    _
  $region9: #{_lambda_.14} parent=0 // pred_fallthru
    _
  // Predicated region
  $region10: #{_lambda_.14} parent=0 // pred_check
    _
  $region11: #{_lambda_.14} parent=0 // pred_check_branch
    %15 = sbr.rel (0) target = $region13
  $region12: #{_lambda_.14} parent=0 // pred_region
    _
  $region13: #{_lambda_.14} parent=0 // pred_fallthru
    _
  // Predicated region
  $region14: #{_lambda_.14} parent=0 // pred_check
    _
  $region15: #{_lambda_.14} parent=0 // pred_check_branch
    %17 = sbr.rel (0) target = $region17
  $region16: #{_lambda_.14} parent=0 // pred_region
    _
  $region17: #{_lambda_.14} parent=0 // pred_fallthru
    _
  // Predicated region
  $region18: #{_lambda_.14} parent=0 // pred_check
    _
  $region19: #{_lambda_.14} parent=0 // pred_check_branch
    %19 = sbr.rel (0) target = $region21
  $region20: #{_lambda_.14} parent=0 // pred_region
    _
  $region21: #{_lambda_.14} parent=0 // pred_fallthru
    _
  %p21 = scmp.eq.s32.totalorder 0, 0
  // Predicated region
  $region22: #{_lambda_.14} parent=0 // pred_check
    %p22 = pneg %p21
  $region23: #{_lambda_.14} parent=0 // pred_check_branch
    %24 = sbr.rel (%p22) target = $region25
  $region24: #{_lambda_.14} parent=0 // pred_region
    %v25 = vld [vmem:[%s0] sm:$0xff]
    %v26 = vld [vmem:[%s0 + $0x8] sm:$0xff]
    %v27 = vld [vmem:[%s1] sm:$0x1]
    %v28 = vld [vmem:[%s2] sm:$0x1]
    %vm29 = vcmask 261120
    %v30 = vsel %vm29, %v25, 0.0
    %31 = vadd.xlane.f32.xlu0 %v30
    %v32 = vpop.xlane.xlu0 %31
    %v33 = vsel %vm29, %v26, 0.0
    %34 = vadd.xlane.f32.xlu0 %v33
    %v35 = vpop.xlane.xlu0 %34
    %v36 = vrcp.pop 32.0
    %v37 = vmul.f32 %v32, %v36
    %v38 = vmul.f32 %v35, %v36
    %v39 = vsub.f32 %v25, %v37
    %v40 = vsub.f32 %v26, %v38
    %v41 = vmul.f32 %v39, %v39
    %v42 = vmul.f32 %v40, %v40
    %v43 = vsel %vm29, %v41, 0.0
    %44 = vadd.xlane.f32.xlu0 %v43
    %v45 = vpop.xlane.xlu0 %44
    %v46 = vsel %vm29, %v42, 0.0
    %47 = vadd.xlane.f32.xlu0 %v46
    %v48 = vpop.xlane.xlu0 %47
    %v49 = vmul.f32 %v45, %v36
    %v50 = vmul.f32 %v48, %v36
    %v51 = vadd.f32 %v49, 1e-05
    %v52 = vadd.f32 %v50, 1e-05
    %v53 = vrsqrt.pop %v51
    %v54 = vrsqrt.pop %v52
    %v55 = vmul.f32 %v39, %v53
    %v56 = vmul.f32 %v40, %v54
    %v58 = vlaneseq
    %v59 = vshrl.u32 %v58, 7
    %v60 = vsub.s32 0, %v59
    %v61 = vrot.slane %v27, %v60
    %v63 = vmul.f32 %v55, %v61
    %v64 = vmul.f32 %v56, %v61
    %v66 = vlaneseq
    %v67 = vshrl.u32 %v66, 7
    %v68 = vsub.s32 0, %v67
    %v69 = vrot.slane %v28, %v68
    %v71 = vadd.f32 %v63, %v69
    %v72 = vadd.f32 %v64, %v69
    %v73 = vpack.c.bf16 %v72, %v71
    %74 = vst.msk [vmem:[#allocation2] sm:$0xff] %vm29, %v73
  $region25: #{_lambda_.14} parent=0 // pred_fallthru
    _
  %v75 = vld [vmem:[#allocation2] sm:$0xff]
  %v76 = vld [vmem:[%s3] sm:$0xf]
  %v77 = vld [vmem:[%s3 + $0x4] sm:$0xf]
  %v78 = vld [vmem:[%s3 + $0x8] sm:$0xf]
  %v79 = vld [vmem:[%s3 + $0xc] sm:$0xf]
  %v80 = vld [vmem:[%s4] sm:$0x1]
  %v82 = vlaneseq
  %v83 = vshrl.u32 %v82, 7
  %v84 = vsub.s32 0, %v83
  %v85 = vrot.slane %v80, %v84
  %v91 = vunpack.c.l.b16 %v76
  %v92 = vunpack.c.l.b16 %v77
  %v93 = vunpack.c.l.b16 %v78
  %v94 = vunpack.c.l.b16 %v79
  %v95 = vpack.c.b16 %v92, %v91
  %v96 = vpack.c.b16 %v94, %v93
  %vm99 = vcmask 261120
  %v101 = vsel %vm99, %v75, 0
  %103 = vmatprep.subr.bf16.mxu0 0
  %104 = vmatpush1.bf16.msra.mxu0 %v95
  %105 = vmatprep.subr.bf16.mxu0 0
  %106 = vmatpush1.bf16.msra.mxu0 %v96
  %107 = vmatprep.subr.bf16.mxu0 0
  %108 = vmatpush1.bf16.msra.mxu0 0
  %109 = vmatprep.subr.bf16.mxu0 0
  %110 = vmatpush1.bf16.msra.mxu0 0
  %111 = vmatprep.subr.bf16.mxu0 0
  %112 = vmatpush1.bf16.msra.mxu0 0
  %113 = vmatprep.subr.bf16.mxu0 0
  %114 = vmatpush1.bf16.msra.mxu0 0
  %115 = vmatprep.subr.bf16.mxu0 0
  %116 = vmatpush1.bf16.msra.mxu0 0
  %117 = vmatprep.subr.bf16.mxu0 0
  %118 = vmatpush1.bf16.msra.mxu0 0
  %119 = vmatprep.subr.bf16.mxu0 0
  %120 = vmatpush1.bf16.msra.mxu0 0
  %121 = vmatprep.subr.bf16.mxu0 0
  %122 = vmatpush1.bf16.msra.mxu0 0
  %123 = vmatprep.subr.bf16.mxu0 0
  %124 = vmatpush1.bf16.msra.mxu0 0
  %125 = vmatprep.subr.bf16.mxu0 0
  %126 = vmatpush1.bf16.msra.mxu0 0
  %127 = vmatprep.subr.bf16.mxu0 0
  %128 = vmatpush1.bf16.msra.mxu0 0
  %129 = vmatprep.subr.bf16.mxu0 0
  %130 = vmatpush1.bf16.msra.mxu0 0
  %131 = vmatprep.subr.bf16.mxu0 0
  %132 = vmatpush1.bf16.msra.mxu0 0
  %133 = vmatprep.subr.bf16.mxu0 0
  %134 = vmatpush1.bf16.msra.mxu0 0
  %135 = vmatprep.mubr.bf16.mxu0 0
  %136 = vmatmul.mubr.bf16.gmra.mrb[0].mxu0 %v101
  %v137 = vpop.f32.mrb[0].mxu0
  %v138 = vadd.f32 %v85, %v137
  %v139 = vpop.f32.mrb[0].mxu0
  %v140 = vpop.f32.mrb[0].mxu0
  %v141 = vadd.f32 %v85, %v140
  %v142 = vpop.f32.mrb[0].mxu0
  %143 = vdwg.mxu0
  %v144 = vmul.f32 %v138, 0.5
  %v145 = vmul.f32 %v141, 0.5
  %v146 = vmul.f32 %v138, 0.70710677
  %v147 = vmul.f32 %v141, 0.70710677
  %v148 = verf.f32.pop %v146
  %v149 = verf.f32.pop %v147
  %v150 = vadd.f32 %v148, 1.0
  %v151 = vadd.f32 %v149, 1.0
  %v152 = vmul.f32 %v144, %v150
  %v153 = vmul.f32 %v145, %v151
  %v154 = vpack.c.bf16 %v153, %v152
  %v156 = vunpack.c.l.b16 %v154
  %v157 = vunpack.c.h.b16 %v154
  %v158 = vpack.c.b16 %v156, %v156
  %v159 = vpack.c.b16 %v157, %v157
  %162 = vst [vmem:[%s5] sm:$0xf] %v158
  %163 = vst [vmem:[%s5 + $0x4] sm:$0xf] %v159
  // Predicated region
  $region26: #{_lambda_.14} parent=0 // pred_check
    _
  $region27: #{_lambda_.14} parent=0 // pred_check_branch
    %165 = sbr.rel (0) target = $region29
  $region28: #{_lambda_.14} parent=0 // pred_region
    _
  $region29: #{_lambda_.14} parent=0 // pred_fallthru
    _
  // Predicated region
  $region30: #{_lambda_.14} parent=0 // pred_check
    _
  $region31: #{_lambda_.14} parent=0 // pred_check_branch
    %167 = sbr.rel (0) target = $region33
  $region32: #{_lambda_.14} parent=0 // pred_region
    _
  $region33: #{_lambda_.14} parent=0 // pred_fallthru
    _

// kernel: _lambda_.15
$region0: #{_lambda_.15}
  #allocation0 [shape = 'u32[]', space=smem, size = 0x4, offset = 0x4, fixed_abs, tag = 'smem constant byte address 0x4 - core index']
  #allocation1 [shape = 'u32[144,128]{1,0:T(1,128)}', space=vmem, size = 0x12000, scoped, tag = 'internal scratch']
  %s0 = inlined_call_operand.vmem [shape: bf16[16,128], index: 0, kind: input, shape index: {}]
  %s1 = inlined_call_operand.vmem [shape: f32[16,32], index: 1, kind: input, shape index: {}]
  %s2 = inlined_call_operand.vmem [shape: bf16[128,32], index: 2, kind: input, shape index: {}]
  %s3 = inlined_call_operand.vmem [shape: f32[1,32], index: 3, kind: input, shape index: {}]
  %s4 = inlined_call_operand.vmem [shape: f32[16,32], index: 4, kind: output, shape index: {}]
  %s5 = sld [smem:[#allocation0]]
  $region26: #{_lambda_.15} parent=0
    _
  %s7 = ssub.s32 1, %s5
  %s8 = scalar_select 0, %s7, %s5
  // Predicated region
  $region2: #{_lambda_.15} parent=0 // pred_check
    _
  $region3: #{_lambda_.15} parent=0 // pred_check_branch
    %10 = sbr.rel (0) target = $region5
  $region4: #{_lambda_.15} parent=0 // pred_region
    _
  $region5: #{_lambda_.15} parent=0 // pred_fallthru
    _
  // Predicated region
  $region6: #{_lambda_.15} parent=0 // pred_check
    _
  $region7: #{_lambda_.15} parent=0 // pred_check_branch
    %12 = sbr.rel (0) target = $region9
  $region8: #{_lambda_.15} parent=0 // pred_region
    _
  $region9: #{_lambda_.15} parent=0 // pred_fallthru
    _
  // Predicated region
  $region10: #{_lambda_.15} parent=0 // pred_check
    _
  $region11: #{_lambda_.15} parent=0 // pred_check_branch
    %14 = sbr.rel (0) target = $region13
  $region12: #{_lambda_.15} parent=0 // pred_region
    _
  $region13: #{_lambda_.15} parent=0 // pred_fallthru
    _
  // Predicated region
  $region14: #{_lambda_.15} parent=0 // pred_check
    _
  $region15: #{_lambda_.15} parent=0 // pred_check_branch
    %16 = sbr.rel (0) target = $region17
  $region16: #{_lambda_.15} parent=0 // pred_region
    _
  $region17: #{_lambda_.15} parent=0 // pred_fallthru
    _
  %v18 = vld [vmem:[%s0] sm:$0xf]
  %v19 = vld [vmem:[%s0 + $0x4] sm:$0xf]
  %v20 = vld [vmem:[%s2] sm:$0xf]
  %v21 = vld [vmem:[%s2 + $0x4] sm:$0xf]
  %v22 = vld [vmem:[%s2 + $0x8] sm:$0xf]
  %v23 = vld [vmem:[%s2 + $0xc] sm:$0xf]
  %v24 = vld [vmem:[%s2 + $0x10] sm:$0xf]
  %v25 = vld [vmem:[%s2 + $0x14] sm:$0xf]
  %v26 = vld [vmem:[%s2 + $0x18] sm:$0xf]
  %v27 = vld [vmem:[%s2 + $0x1c] sm:$0xf]
  %v28 = vld [vmem:[%s2 + $0x20] sm:$0xf]
  %v29 = vld [vmem:[%s2 + $0x24] sm:$0xf]
  %v30 = vld [vmem:[%s2 + $0x28] sm:$0xf]
  %v31 = vld [vmem:[%s2 + $0x2c] sm:$0xf]
  %v32 = vld [vmem:[%s2 + $0x30] sm:$0xf]
  %v33 = vld [vmem:[%s2 + $0x34] sm:$0xf]
  %v34 = vld [vmem:[%s2 + $0x38] sm:$0xf]
  %v35 = vld [vmem:[%s2 + $0x3c] sm:$0xf]
  %v38 = vunpack.c.l.b16 %v18
  %v39 = vunpack.c.l.b16 %v19
  %v40 = vpack.c.b16 %v39, %v38
  %v58 = vunpack.c.l.b16 %v20
  %v59 = vunpack.c.l.b16 %v21
  %v60 = vunpack.c.l.b16 %v22
  %v61 = vunpack.c.l.b16 %v23
  %v62 = vunpack.c.l.b16 %v24
  %v63 = vunpack.c.l.b16 %v25
  %v64 = vunpack.c.l.b16 %v26
  %v65 = vunpack.c.l.b16 %v27
  %v66 = vunpack.c.l.b16 %v28
  %v67 = vunpack.c.l.b16 %v29
  %v68 = vunpack.c.l.b16 %v30
  %v69 = vunpack.c.l.b16 %v31
  %v70 = vunpack.c.l.b16 %v32
  %v71 = vunpack.c.l.b16 %v33
  %v72 = vunpack.c.l.b16 %v34
  %v73 = vunpack.c.l.b16 %v35
  %v74 = vpack.c.b16 %v59, %v58
  %v75 = vpack.c.b16 %v61, %v60
  %v76 = vpack.c.b16 %v63, %v62
  %v77 = vpack.c.b16 %v65, %v64
  %v78 = vpack.c.b16 %v67, %v66
  %v79 = vpack.c.b16 %v69, %v68
  %v80 = vpack.c.b16 %v71, %v70
  %v81 = vpack.c.b16 %v73, %v72
  %90 = vmatprep.subr.bf16.mxu0 0
  %91 = vmatpush1.bf16.msra.mxu0 %v74
  %92 = vmatprep.subr.bf16.mxu0 0
  %93 = vmatpush1.bf16.msra.mxu0 %v75
  %94 = vmatprep.subr.bf16.mxu0 0
  %95 = vmatpush1.bf16.msra.mxu0 %v76
  %96 = vmatprep.subr.bf16.mxu0 0
  %97 = vmatpush1.bf16.msra.mxu0 %v77
  %98 = vmatprep.subr.bf16.mxu0 0
  %99 = vmatpush1.bf16.msra.mxu0 %v78
  %100 = vmatprep.subr.bf16.mxu0 0
  %101 = vmatpush1.bf16.msra.mxu0 %v79
  %102 = vmatprep.subr.bf16.mxu0 0
  %103 = vmatpush1.bf16.msra.mxu0 %v80
  %104 = vmatprep.subr.bf16.mxu0 0
  %105 = vmatpush1.bf16.msra.mxu0 %v81
  %106 = vmatprep.subr.bf16.mxu0 0
  %107 = vmatpush1.bf16.msra.mxu0 0
  %108 = vmatprep.subr.bf16.mxu0 0
  %109 = vmatpush1.bf16.msra.mxu0 0
  %110 = vmatprep.subr.bf16.mxu0 0
  %111 = vmatpush1.bf16.msra.mxu0 0
  %112 = vmatprep.subr.bf16.mxu0 0
  %113 = vmatpush1.bf16.msra.mxu0 0
  %114 = vmatprep.subr.bf16.mxu0 0
  %115 = vmatpush1.bf16.msra.mxu0 0
  %116 = vmatprep.subr.bf16.mxu0 0
  %117 = vmatpush1.bf16.msra.mxu0 0
  %118 = vmatprep.subr.bf16.mxu0 0
  %119 = vmatpush1.bf16.msra.mxu0 0
  %120 = vmatprep.subr.bf16.mxu0 0
  %121 = vmatpush1.bf16.msra.mxu0 0
  %122 = vmatprep.mubr.bf16.mxu0 0
  %123 = vmatmul.mubr.bf16.gmra.mrb[0].mxu0 %v40
  %v124 = vpop.f32.mrb[0].mxu0
  %v125 = vadd.f32 0.0, %v124
  %v126 = vpop.f32.mrb[0].mxu0
  %v127 = vpop.f32.mrb[0].mxu0
  %v128 = vadd.f32 0.0, %v127
  %v129 = vpop.f32.mrb[0].mxu0
  %130 = vdwg.mxu0
  %v131 = vld [vmem:[%s1] sm:$0xff]
  %v132 = vld [vmem:[%s1 + $0x8] sm:$0xff]
  %v133 = vadd.f32 %v131, %v125
  %v134 = vadd.f32 %v132, %v128
  %v135 = vld [vmem:[%s3] sm:$0x1]
  %v137 = vlaneseq
  %v138 = vshrl.u32 %v137, 7
  %v139 = vsub.s32 0, %v138
  %v140 = vrot.slane %v135, %v139
  %v142 = vadd.f32 %v133, %v140
  %v143 = vadd.f32 %v134, %v140
  %vm144 = vcmask 261120
  %145 = vst.msk [vmem:[%s4] sm:$0xff] %vm144, %v142
  %146 = vst.msk [vmem:[%s4 + $0x8] sm:$0xff] %vm144, %v143
  // Predicated region
  $region18: #{_lambda_.15} parent=0 // pred_check
    _
  $region19: #{_lambda_.15} parent=0 // pred_check_branch
    %148 = sbr.rel (0) target = $region21
  $region20: #{_lambda_.15} parent=0 // pred_region
    _
  $region21: #{_lambda_.15} parent=0 // pred_fallthru
    _
  // Predicated region
  $region22: #{_lambda_.15} parent=0 // pred_check
    _
  $region23: #{_lambda_.15} parent=0 // pred_check_branch
    %150 = sbr.rel (0) target = $region25
  $region24: #{_lambda_.15} parent=0 // pred_region
    _
  $region25: #{_lambda_.15} parent=0 // pred_fallthru
    _

// kernel: _lambda_.21
$region0: #{_lambda_.21}
  #allocation0 [shape = 'u32[]', space=smem, size = 0x4, offset = 0x4, fixed_abs, tag = 'smem constant byte address 0x4 - core index']
  #allocation1 [shape = 'u32[144,128]{1,0:T(1,128)}', space=vmem, size = 0x12000, scoped, tag = 'internal scratch']
  #allocation2 [shape = 'bf16[16,32]{1,0:T(16,128)(2,1)}', space=vmem, size = 0x1000, scoped, tag = 'scratch operand']
  %s0 = inlined_call_operand.vmem [shape: f32[16,32], index: 0, kind: input, shape index: {}]
  %s1 = inlined_call_operand.vmem [shape: f32[1,32], index: 1, kind: input, shape index: {}]
  %s2 = inlined_call_operand.vmem [shape: f32[1,32], index: 2, kind: input, shape index: {}]
  %s3 = inlined_call_operand.vmem [shape: bf16[128,32], index: 3, kind: input, shape index: {}]
  %s4 = inlined_call_operand.hbm [shape: f32[16,128], index: 4, kind: output, shape index: {}]
  %s5 = sld [smem:[#allocation0]]
  $region30: #{_lambda_.21} parent=0
    _
  %s7 = ssub.s32 1, %s5
  %s8 = scalar_select 0, %s7, %s5
  $region1: #{_lambda_.21} parent=0
    #allocation3 [shape = 'u8[8192]{0}', space=vmem, size = 0x2000, scoped, tag = 'output window, operand 0, single buffered']
    #allocation4 [shape = 's32[1]{0}', space=sflag, size = 0x4, scoped, tag = 'scoped memory for _lambda_.21']
    %9 = vsyncpa [#allocation4], 0
    // Predicated region
    $region2: #{_lambda_.21} parent=1 // pred_check
      _
    $region3: #{_lambda_.21} parent=1 // pred_check_branch
      %11 = sbr.rel (0) target = $region5
    $region4: #{_lambda_.21} parent=1 // pred_region
      _
    $region5: #{_lambda_.21} parent=1 // pred_fallthru
      _
    // Predicated region
    $region6: #{_lambda_.21} parent=1 // pred_check
      _
    $region7: #{_lambda_.21} parent=1 // pred_check_branch
      %13 = sbr.rel (0) target = $region9
    $region8: #{_lambda_.21} parent=1 // pred_region
      _
    $region9: #{_lambda_.21} parent=1 // pred_fallthru
      _
    // Predicated region
    $region10: #{_lambda_.21} parent=1 // pred_check
      _
    $region11: #{_lambda_.21} parent=1 // pred_check_branch
      %15 = sbr.rel (0) target = $region13
    $region12: #{_lambda_.21} parent=1 // pred_region
      _
    $region13: #{_lambda_.21} parent=1 // pred_fallthru
      _
    // Predicated region
    $region14: #{_lambda_.21} parent=1 // pred_check
      _
    $region15: #{_lambda_.21} parent=1 // pred_check_branch
      %17 = sbr.rel (0) target = $region17
    $region16: #{_lambda_.21} parent=1 // pred_region
      _
    $region17: #{_lambda_.21} parent=1 // pred_fallthru
      _
    %p19 = scmp.eq.s32.totalorder 0, 0
    // Predicated region
    $region18: #{_lambda_.21} parent=1 // pred_check
      %p20 = pneg %p19
    $region19: #{_lambda_.21} parent=1 // pred_check_branch
      %22 = sbr.rel (%p20) target = $region21
    $region20: #{_lambda_.21} parent=1 // pred_region
      %v23 = vld [vmem:[%s0] sm:$0xff]
      %v24 = vld [vmem:[%s0 + $0x8] sm:$0xff]
      %v25 = vld [vmem:[%s1] sm:$0x1]
      %v26 = vld [vmem:[%s2] sm:$0x1]
      %vm27 = vcmask 261120
      %v28 = vsel %vm27, %v23, 0.0
      %29 = vadd.xlane.f32.xlu0 %v28
      %v30 = vpop.xlane.xlu0 %29
      %v31 = vsel %vm27, %v24, 0.0
      %32 = vadd.xlane.f32.xlu0 %v31
      %v33 = vpop.xlane.xlu0 %32
      %v34 = vrcp.pop 32.0
      %v35 = vmul.f32 %v30, %v34
      %v36 = vmul.f32 %v33, %v34
      %v37 = vsub.f32 %v23, %v35
      %v38 = vsub.f32 %v24, %v36
      %v39 = vmul.f32 %v37, %v37
      %v40 = vmul.f32 %v38, %v38
      %v41 = vsel %vm27, %v39, 0.0
      %42 = vadd.xlane.f32.xlu0 %v41
      %v43 = vpop.xlane.xlu0 %42
      %v44 = vsel %vm27, %v40, 0.0
      %45 = vadd.xlane.f32.xlu0 %v44
      %v46 = vpop.xlane.xlu0 %45
      %v47 = vmul.f32 %v43, %v34
      %v48 = vmul.f32 %v46, %v34
      %v49 = vadd.f32 %v47, 1e-05
      %v50 = vadd.f32 %v48, 1e-05
      %v51 = vrsqrt.pop %v49
      %v52 = vrsqrt.pop %v50
      %v53 = vmul.f32 %v37, %v51
      %v54 = vmul.f32 %v38, %v52
      %v56 = vlaneseq
      %v57 = vshrl.u32 %v56, 7
      %v58 = vsub.s32 0, %v57
      %v59 = vrot.slane %v25, %v58
      %v61 = vmul.f32 %v53, %v59
      %v62 = vmul.f32 %v54, %v59
      %v64 = vlaneseq
      %v65 = vshrl.u32 %v64, 7
      %v66 = vsub.s32 0, %v65
      %v67 = vrot.slane %v26, %v66
      %v69 = vadd.f32 %v61, %v67
      %v70 = vadd.f32 %v62, %v67
      %v71 = vpack.c.bf16 %v70, %v69
      %72 = vst.msk [vmem:[#allocation2] sm:$0xff] %vm27, %v71
    $region21: #{_lambda_.21} parent=1 // pred_fallthru
      _
    %v73 = vld [vmem:[#allocation2] sm:$0xff]
    %v74 = vld [vmem:[%s3] sm:$0xf]
    %v75 = vld [vmem:[%s3 + $0x4] sm:$0xf]
    %v76 = vld [vmem:[%s3 + $0x8] sm:$0xf]
    %v77 = vld [vmem:[%s3 + $0xc] sm:$0xf]
    %v78 = vld [vmem:[%s3 + $0x10] sm:$0xf]
    %v79 = vld [vmem:[%s3 + $0x14] sm:$0xf]
    %v80 = vld [vmem:[%s3 + $0x18] sm:$0xf]
    %v81 = vld [vmem:[%s3 + $0x1c] sm:$0xf]
    %v82 = vld [vmem:[%s3 + $0x20] sm:$0xf]
    %v83 = vld [vmem:[%s3 + $0x24] sm:$0xf]
    %v84 = vld [vmem:[%s3 + $0x28] sm:$0xf]
    %v85 = vld [vmem:[%s3 + $0x2c] sm:$0xf]
    %v86 = vld [vmem:[%s3 + $0x30] sm:$0xf]
    %v87 = vld [vmem:[%s3 + $0x34] sm:$0xf]
    %v88 = vld [vmem:[%s3 + $0x38] sm:$0xf]
    %v89 = vld [vmem:[%s3 + $0x3c] sm:$0xf]
    %v106 = vunpack.c.l.b16 %v74
    %v107 = vunpack.c.l.b16 %v75
    %v108 = vunpack.c.l.b16 %v76
    %v109 = vunpack.c.l.b16 %v77
    %v110 = vunpack.c.l.b16 %v78
    %v111 = vunpack.c.l.b16 %v79
    %v112 = vunpack.c.l.b16 %v80
    %v113 = vunpack.c.l.b16 %v81
    %v114 = vunpack.c.l.b16 %v82
    %v115 = vunpack.c.l.b16 %v83
    %v116 = vunpack.c.l.b16 %v84
    %v117 = vunpack.c.l.b16 %v85
    %v118 = vunpack.c.l.b16 %v86
    %v119 = vunpack.c.l.b16 %v87
    %v120 = vunpack.c.l.b16 %v88
    %v121 = vunpack.c.l.b16 %v89
    %v122 = vpack.c.b16 %v107, %v106
    %v123 = vpack.c.b16 %v109, %v108
    %v124 = vpack.c.b16 %v111, %v110
    %v125 = vpack.c.b16 %v113, %v112
    %v126 = vpack.c.b16 %v115, %v114
    %v127 = vpack.c.b16 %v117, %v116
    %v128 = vpack.c.b16 %v119, %v118
    %v129 = vpack.c.b16 %v121, %v120
    %vm130 = vcmask 261120
    %v132 = vsel %vm130, %v73, 0
    %v135 = vsel %vm130, %v122, 0
    %v138 = vsel %vm130, %v123, 0
    %v141 = vsel %vm130, %v124, 0
    %v144 = vsel %vm130, %v125, 0
    %v147 = vsel %vm130, %v126, 0
    %v150 = vsel %vm130, %v127, 0
    %v153 = vsel %vm130, %v128, 0
    %v156 = vsel %vm130, %v129, 0
    %158 = vmatprep.subr.bf16.mxu0 0
    %159 = vmatpush1.bf16.xpose.msra.mxu0 %v135
    %160 = vmatprep.subr.bf16.mxu0 0
    %161 = vmatpush1.bf16.xpose.msra.mxu0 %v138
    %162 = vmatprep.subr.bf16.mxu0 0
    %163 = vmatpush1.bf16.xpose.msra.mxu0 %v141
    %164 = vmatprep.subr.bf16.mxu0 0
    %165 = vmatpush1.bf16.xpose.msra.mxu0 %v144
    %166 = vmatprep.subr.bf16.mxu0 0
    %167 = vmatpush1.bf16.xpose.msra.mxu0 %v147
    %168 = vmatprep.subr.bf16.mxu0 0
    %169 = vmatpush1.bf16.xpose.msra.mxu0 %v150
    %170 = vmatprep.subr.bf16.mxu0 0
    %171 = vmatpush1.bf16.xpose.msra.mxu0 %v153
    %172 = vmatprep.subr.bf16.mxu0 0
    %173 = vmatpush1.bf16.xpose.msra.mxu0 %v156
    %174 = vmatprep.subr.bf16.mxu0 0
    %175 = vmatpush1.bf16.xpose.msra.mxu0 0
    %176 = vmatprep.subr.bf16.mxu0 0
    %177 = vmatpush1.bf16.xpose.msra.mxu0 0
    %178 = vmatprep.subr.bf16.mxu0 0
    %179 = vmatpush1.bf16.xpose.msra.mxu0 0
    %180 = vmatprep.subr.bf16.mxu0 0
    %181 = vmatpush1.bf16.xpose.msra.mxu0 0
    %182 = vmatprep.subr.bf16.mxu0 0
    %183 = vmatpush1.bf16.xpose.msra.mxu0 0
    %184 = vmatprep.subr.bf16.mxu0 0
    %185 = vmatpush1.bf16.xpose.msra.mxu0 0
    %186 = vmatprep.subr.bf16.mxu0 0
    %187 = vmatpush1.bf16.xpose.msra.mxu0 0
    %188 = vmatprep.subr.bf16.mxu0 0
    %189 = vmatpush1.bf16.xpose.msra.mxu0 0
    %190 = vmatprep.mubr.bf16.mxu0 0
    %191 = vmatmul.mubr.bf16.gmra.mrb[0].mxu0 %v132
    %v192 = vpop.f32.mrb[0].mxu0
    %v193 = vadd.f32 0.0, %v192
    %v194 = vpop.f32.mrb[0].mxu0
    %v195 = vpop.f32.mrb[0].mxu0
    %v196 = vadd.f32 0.0, %v195
    %v197 = vpop.f32.mrb[0].mxu0
    %198 = vdwg.mxu0
    %199 = vst [vmem:[#allocation3] sm:$0xff] %v193
    %200 = vst [vmem:[#allocation3 + $0x8] sm:$0xff] %v196
    // Predicated region
    $region22: #{_lambda_.21} parent=1 // pred_check
      _
    $region23: #{_lambda_.21} parent=1 // pred_check_branch
      %202 = sbr.rel (0) target = $region25
    $region24: #{_lambda_.21} parent=1 // pred_region
      %s204 = ssub.s32 256, 256
      %205 = vsyncadd [#allocation4], %s204
      %s206 = sshll.u32 [#allocation3], 4
      %s207 = int_to_ptr.vmem [resolvable:$true] %s206
      %212 = dma.vmem_to_hbm [thread:$0]  %s207, 256, %s4, [#allocation4], 128, 128, 8
    $region25: #{_lambda_.21} parent=1 // pred_fallthru
      _
    // Predicated region
    $region26: #{_lambda_.21} parent=1 // pred_check
      _
    $region27: #{_lambda_.21} parent=1 // pred_check_branch
      %214 = sbr.rel (0) target = $region29
    $region28: #{_lambda_.21} parent=1 // pred_region
      %215 = dma.done [#allocation4], 256
    $region29: #{_lambda_.21} parent=1 // pred_fallthru
      _
    %216 = vsyncpa [#allocation4], 1

</llo_original>
